<compile_context>
chip_gen: v5e
topology: v5e:2x2
jax: 0.10.0
libtpu: 0.0.40
codegen_flags: <defaults>
</compile_context>

<pallas_src>
import functools
import math

import jax
import jax.numpy as jnp
from jax.experimental import pallas as pl
from jax.experimental.pallas import tpu as pltpu


def mlp_kernel(x_ref, w1_ref, b1_ref, w2_ref, b2_ref, w3_ref, b3_ref, out_ref):
    # Layer 1: Linear(in_dim, 512) + ReLU. bf16 MXU matmul, f32 accumulation;
    # bias-add / ReLU in f32 on the VPU.
    h = jnp.dot(x_ref[...], w1_ref[...], preferred_element_type=jnp.float32)
    h = jnp.maximum(h + b1_ref[...], 0.0)
    # Layer 2: Linear(512, 256) + ReLU. Downcast only at the MXU boundary.
    h = jnp.dot(h.astype(w2_ref.dtype), w2_ref[...],
                preferred_element_type=jnp.float32)
    h = jnp.maximum(h + b2_ref[...], 0.0)
    # Layer 3: Linear(256, 256); .view(B, -1) on a (B, 256) tensor is a no-op.
    o = jnp.dot(h.astype(w3_ref.dtype), w3_ref[...],
                preferred_element_type=jnp.float32)
    out_ref[...] = (o + b3_ref[...]).astype(out_ref.dtype)


def _round_up(x, m):
    return (x + m - 1) // m * m


def _resident_spec(shape, n_buffers):
    """BlockSpec for an operand whose block index is constant across the grid."""
    index_map = lambda i: (0, 0)
    if n_buffers is not None:
        try:
            return pl.BlockSpec(shape, index_map,
                                pipeline_mode=pl.Buffered(n_buffers))
        except TypeError:  # older jax: BlockSpec has no pipeline_mode kwarg
            pass
    return pl.BlockSpec(shape, index_map)


@functools.partial(jax.jit, static_argnames=("block_rows", "resident_buffers"))
def resnet50fc_forward(x, w1, b1, w2, b2, w3, b3, *, block_rows=512,
                       resident_buffers=1):
    """Pallas forward for ResNet50Fc.

    x  : (B, in_dim)
    w1 : (512, in_dim),  b1 : (512,)   -- PyTorch Linear layout (out, in)
    w2 : (256, 512),     b2 : (256,)
    w3 : (256, 256),     b3 : (256,)
    Returns (B, 256) == linear_nn(x).view(B, -1), in x's dtype.
    """
    B, in_dim = x.shape
    h1_dim = w1.shape[0]
    h2_dim = w2.shape[0]
    out_dim = w3.shape[0]
    out_dtype = x.dtype

    # Glue (constant-folded under jit for fixed params): (in, out)-layout bf16
    # weights for the MXU, f32 (1, N) biases for lane-broadcast on the VPU.
    mm_dtype = jnp.bfloat16
    x_c = x.astype(mm_dtype)
    w1_t = jnp.transpose(w1).astype(mm_dtype)
    w2_t = jnp.transpose(w2).astype(mm_dtype)
    w3_t = jnp.transpose(w3).astype(mm_dtype)
    b1_2d = b1.reshape(1, h1_dim).astype(jnp.float32)
    b2_2d = b2.reshape(1, h2_dim).astype(jnp.float32)
    b3_2d = b3.reshape(1, out_dim).astype(jnp.float32)

    # --- batch tile selection ------------------------------------------------
    b8 = _round_up(B, 8)  # sublane multiple
    if b8 >= 2 * 128:
        # >= 2 grid steps so the "parallel" batch axis can shard across v7x's
        # two TensorCores; rows a multiple of 128 for full MXU M-cadence.
        bm = min(block_rows, _round_up(pl.cdiv(b8, 2), 128))
    else:
        bm = b8  # tiny batch: single grid step, no extra padding

    # --- VMEM budget (cap 48 MiB: fits v7x's 64 MiB/TC; v5e/v6e have 128 MiB) -
    mm_bytes = jnp.dtype(mm_dtype).itemsize
    out_bytes = jnp.dtype(out_dtype).itemsize
    # Worst case: weights/biases double-buffered (if pl.Buffered(1) is honoured
    # this is an over-estimate, which only makes the budget safer).
    resident_bytes = 2 * ((w1_t.size + w2_t.size + w3_t.size) * mm_bytes
                          + (b1_2d.size + b2_2d.size + b3_2d.size) * 4)

    def live_bytes(rows):
        x_tile = 2 * rows * in_dim * mm_bytes              # double-buffered in
        o_tile = 2 * rows * out_dim * out_bytes            # double-buffered out
        acts = 2 * rows * (h1_dim + h2_dim + out_dim) * 4  # f32 intermediates
        return resident_bytes + x_tile + o_tile + acts

    VMEM_CAP = 48 << 20
    HEADROOM = 8 << 20
    while bm > 8 and live_bytes(bm) + HEADROOM > VMEM_CAP:
        bm = max(8, _round_up(bm // 2, 8))
    # TODO(synk): for extreme in_dim (working set > 48 MiB even at bm=8), add a
    # K ("arbitrary", last) grid axis over in_dim with an f32 accumulator and
    # pl.when init/finalize instead of keeping the whole (in_dim, 512) W1 block
    # resident.
    vmem_limit = int(max(16 << 20, min(VMEM_CAP, live_bytes(bm) + HEADROOM)))

    padded_b = _round_up(b8, bm)
    if padded_b != B:
        x_c = jnp.pad(x_c, ((0, padded_b - B), (0, 0)))
    grid = (padded_b // bm,)

    flops = 2 * padded_b * (in_dim * h1_dim + h1_dim * h2_dim + h2_dim * out_dim)
    bytes_accessed = int(padded_b * (in_dim * mm_bytes + out_dim * out_bytes)
                         + resident_bytes // 2)
    cost = pl.CostEstimate(flops=flops, transcendentals=0,
                           bytes_accessed=bytes_accessed)

    out = pl.pallas_call(
        mlp_kernel,
        out_shape=jax.ShapeDtypeStruct((padded_b, out_dim), out_dtype),
        grid_spec=pltpu.PrefetchScalarGridSpec(
            num_scalar_prefetch=0,
            grid=grid,
            in_specs=[
                pl.BlockSpec((bm, in_dim), lambda i: (i, 0)),         # x tile
                _resident_spec((in_dim, h1_dim), resident_buffers),   # W1
                _resident_spec((1, h1_dim), resident_buffers),        # b1
                _resident_spec((h1_dim, h2_dim), resident_buffers),   # W2
                _resident_spec((1, h2_dim), resident_buffers),        # b2
                _resident_spec((h2_dim, out_dim), resident_buffers),  # W3
                _resident_spec((1, out_dim), resident_buffers),       # b3
            ],
            out_specs=pl.BlockSpec((bm, out_dim), lambda i: (i, 0)),
        ),
        compiler_params=pltpu.CompilerParams(
            dimension_semantics=("parallel",),  # shard batch across TCs (v7x)
            vmem_limit_bytes=vmem_limit,
        ),
        cost_estimate=cost,
    )(x_c, w1_t, b1_2d, w2_t, b2_2d, w3_t, b3_2d)

    # TODO(synk): checkpoint loading (model_path) and the `normalize` flag are
    # host-side config with no compute; not represented in the kernel.
    return out[:B]


def resnet50fc_ref(x, w1, b1, w2, b2, w3, b3):
    h = jax.nn.relu(x @ w1.T + b1)
    h = jax.nn.relu(h @ w2.T + b2)
    return h @ w3.T + b3


if __name__ == "__main__":
    # Small shapes: batch=8, len(FEATURES)=32; hidden dims fixed by the module.
    B, in_dim = 8, 32
    h1_dim, h2_dim, out_dim = 512, 256, 256

    key = jax.random.PRNGKey(0)
    ks = jax.random.split(key, 7)
    x = jax.random.normal(ks[0], (B, in_dim), dtype=jnp.float32)

    def linear_init(kw, kb, out_d, in_d):
        bound = 1.0 / math.sqrt(in_d)
        w = jax.random.uniform(kw, (out_d, in_d), jnp.float32, -bound, bound)
        b = jax.random.uniform(kb, (out_d,), jnp.float32, -bound, bound)
        return w, b

    w1, b1 = linear_init(ks[1], ks[2], h1_dim, in_dim)
    w2, b2 = linear_init(ks[3], ks[4], h2_dim, h1_dim)
    w3, b3 = linear_init(ks[5], ks[6], out_dim, h2_dim)

    try:
        out = jax.block_until_ready(
            resnet50fc_forward(x, w1, b1, w2, b2, w3, b3))
    except Exception:
        # Portability fallback: some Pallas/Mosaic versions only honour
        # pl.Buffered inside emit_pipeline; default double-buffering of the
        # resident weights is semantically identical (~1 MiB extra VMEM here).
        out = jax.block_until_ready(
            resnet50fc_forward(x, w1, b1, w2, b2, w3, b3,
                               resident_buffers=None))

    ref = resnet50fc_ref(x, w1, b1, w2, b2, w3, b3)
    assert out.shape == (B, out_dim) and out.dtype == x.dtype
    # bf16 MXU matmuls (f32 accumulation) vs the all-f32 reference.
    assert jnp.allclose(out, ref, atol=3e-2, rtol=3e-2), "mismatch vs reference"

    print("KERNEL_OK")
</pallas_src>

<mosaic_0001>
module attributes {stable_mosaic.version = 11 : i64} {
  func.func @mlp_kernel(%arg0: i32, %arg1: memref<8x32xbf16, #tpu.memory_space<vmem>>, %arg2: memref<32x512xbf16, #tpu.memory_space<vmem>>, %arg3: memref<1x512xf32, #tpu.memory_space<vmem>>, %arg4: memref<512x256xbf16, #tpu.memory_space<vmem>>, %arg5: memref<1x256xf32, #tpu.memory_space<vmem>>, %arg6: memref<256x256xbf16, #tpu.memory_space<vmem>>, %arg7: memref<1x256xf32, #tpu.memory_space<vmem>>, %arg8: memref<8x256xf32, #tpu.memory_space<vmem>>) attributes {dimension_semantics = [#tpu.dimension_semantics<parallel>], iteration_bounds = array<i64: 1>, scalar_prefetch = 0 : i64, scratch_operands = 0 : i64, tpu.core_type = #tpu.core_type<tc>, window_params = [{transform_indices = @transform_0, window_bounds = array<i64: 8, 32>}, {pipeline_mode = #tpu.pipeline_mode<synchronous>, transform_indices = @transform_1, window_bounds = array<i64: 32, 512>}, {pipeline_mode = #tpu.pipeline_mode<synchronous>, transform_indices = @transform_2, window_bounds = array<i64: 1, 512>}, {pipeline_mode = #tpu.pipeline_mode<synchronous>, transform_indices = @transform_3, window_bounds = array<i64: 512, 256>}, {pipeline_mode = #tpu.pipeline_mode<synchronous>, transform_indices = @transform_4, window_bounds = array<i64: 1, 256>}, {pipeline_mode = #tpu.pipeline_mode<synchronous>, transform_indices = @transform_5, window_bounds = array<i64: 256, 256>}, {pipeline_mode = #tpu.pipeline_mode<synchronous>, transform_indices = @transform_6, window_bounds = array<i64: 1, 256>}, {transform_indices = @transform_7, window_bounds = array<i64: 8, 256>}]} {
    %c0 = arith.constant 0 : index
    %c0_0 = arith.constant 0 : index
    %0 = vector.load %arg1[%c0, %c0_0] : memref<8x32xbf16, #tpu.memory_space<vmem>>, vector<8x32xbf16>
    %c0_1 = arith.constant 0 : index
    %c0_2 = arith.constant 0 : index
    %1 = vector.load %arg2[%c0_1, %c0_2] : memref<32x512xbf16, #tpu.memory_space<vmem>>, vector<32x512xbf16>
    %cst = arith.constant dense<0.000000e+00> : vector<8x512xf32>
    %2 = tpu.matmul %0, %1, %cst {dimension_numbers = #tpu.dot_dimension_numbers<[1], [0], [0], [1], [0, 0, 1, 1], [], []>} : vector<8x32xbf16>, vector<32x512xbf16>, vector<8x512xf32> -> vector<8x512xf32>
    %c0_3 = arith.constant 0 : index
    %c0_4 = arith.constant 0 : index
    %3 = vector.load %arg3[%c0_3, %c0_4] : memref<1x512xf32, #tpu.memory_space<vmem>>, vector<1x512xf32>
    %4 = vector.broadcast %3 : vector<1x512xf32> to vector<8x512xf32>
    %5 = arith.addf %2, %4 : vector<8x512xf32>
    %cst_5 = arith.constant 0.000000e+00 : f32
    %6 = vector.broadcast %cst_5 : f32 to vector<8x512xf32>
    %7 = arith.maximumf %5, %6 : vector<8x512xf32>
    %8 = arith.truncf %7 : vector<8x512xf32> to vector<8x512xbf16>
    %c0_6 = arith.constant 0 : index
    %c0_7 = arith.constant 0 : index
    %9 = vector.load %arg4[%c0_6, %c0_7] : memref<512x256xbf16, #tpu.memory_space<vmem>>, vector<512x256xbf16>
    %cst_8 = arith.constant dense<0.000000e+00> : vector<8x256xf32>
    %10 = tpu.matmul %8, %9, %cst_8 {dimension_numbers = #tpu.dot_dimension_numbers<[1], [0], [0], [1], [0, 0, 1, 1], [], []>} : vector<8x512xbf16>, vector<512x256xbf16>, vector<8x256xf32> -> vector<8x256xf32>
    %c0_9 = arith.constant 0 : index
    %c0_10 = arith.constant 0 : index
    %11 = vector.load %arg5[%c0_9, %c0_10] : memref<1x256xf32, #tpu.memory_space<vmem>>, vector<1x256xf32>
    %12 = vector.broadcast %11 : vector<1x256xf32> to vector<8x256xf32>
    %13 = arith.addf %10, %12 : vector<8x256xf32>
    %cst_11 = arith.constant 0.000000e+00 : f32
    %14 = vector.broadcast %cst_11 : f32 to vector<8x256xf32>
    %15 = arith.maximumf %13, %14 : vector<8x256xf32>
    %16 = arith.truncf %15 : vector<8x256xf32> to vector<8x256xbf16>
    %c0_12 = arith.constant 0 : index
    %c0_13 = arith.constant 0 : index
    %17 = vector.load %arg6[%c0_12, %c0_13] : memref<256x256xbf16, #tpu.memory_space<vmem>>, vector<256x256xbf16>
    %cst_14 = arith.constant dense<0.000000e+00> : vector<8x256xf32>
    %18 = tpu.matmul %16, %17, %cst_14 {dimension_numbers = #tpu.dot_dimension_numbers<[1], [0], [0], [1], [0, 0, 1, 1], [], []>} : vector<8x256xbf16>, vector<256x256xbf16>, vector<8x256xf32> -> vector<8x256xf32>
    %c0_15 = arith.constant 0 : index
    %c0_16 = arith.constant 0 : index
    %19 = vector.load %arg7[%c0_15, %c0_16] : memref<1x256xf32, #tpu.memory_space<vmem>>, vector<1x256xf32>
    %20 = vector.broadcast %19 : vector<1x256xf32> to vector<8x256xf32>
    %21 = arith.addf %18, %20 : vector<8x256xf32>
    %c0_17 = arith.constant 0 : index
    %c0_18 = arith.constant 0 : index
    %22 = vector.load %arg8[%c0_17, %c0_18] : memref<8x256xf32, #tpu.memory_space<vmem>>, vector<8x256xf32>
    tpu.vector_store %arg8[%c0_17, %c0_18], %21 {strides = array<i32>} : memref<8x256xf32, #tpu.memory_space<vmem>>, vector<8x256xf32>,
    return
  }
  func.func @transform_0(%arg0: i32) -> (i32, i32) {
    %c0_i32 = arith.constant 0 : i32
    %c0_i32_0 = arith.constant 0 : i32
    return %arg0, %c0_i32 : i32, i32
  }
  func.func @transform_1(%arg0: i32) -> (i32, i32) {
    %c0_i32 = arith.constant 0 : i32
    %c0_i32_0 = arith.constant 0 : i32
    %c0_i32_1 = arith.constant 0 : i32
    return %c0_i32, %c0_i32_0 : i32, i32
  }
  func.func @transform_2(%arg0: i32) -> (i32, i32) {
    %c0_i32 = arith.constant 0 : i32
    %c0_i32_0 = arith.constant 0 : i32
    %c0_i32_1 = arith.constant 0 : i32
    return %c0_i32, %c0_i32_0 : i32, i32
  }
  func.func @transform_3(%arg0: i32) -> (i32, i32) {
    %c0_i32 = arith.constant 0 : i32
    %c0_i32_0 = arith.constant 0 : i32
    %c0_i32_1 = arith.constant 0 : i32
    return %c0_i32, %c0_i32_0 : i32, i32
  }
  func.func @transform_4(%arg0: i32) -> (i32, i32) {
    %c0_i32 = arith.constant 0 : i32
    %c0_i32_0 = arith.constant 0 : i32
    %c0_i32_1 = arith.constant 0 : i32
    return %c0_i32, %c0_i32_0 : i32, i32
  }
  func.func @transform_5(%arg0: i32) -> (i32, i32) {
    %c0_i32 = arith.constant 0 : i32
    %c0_i32_0 = arith.constant 0 : i32
    %c0_i32_1 = arith.constant 0 : i32
    return %c0_i32, %c0_i32_0 : i32, i32
  }
  func.func @transform_6(%arg0: i32) -> (i32, i32) {
    %c0_i32 = arith.constant 0 : i32
    %c0_i32_0 = arith.constant 0 : i32
    %c0_i32_1 = arith.constant 0 : i32
    return %c0_i32, %c0_i32_0 : i32, i32
  }
  func.func @transform_7(%arg0: i32) -> (i32, i32) {
    %c0_i32 = arith.constant 0 : i32
    %c0_i32_0 = arith.constant 0 : i32
    return %arg0, %c0_i32 : i32, i32
  }
}

module attributes {stable_mosaic.version = 11 : i64} {
  func.func @mlp_kernel(%arg0: i32, %arg1: memref<8x32xbf16, #tpu.memory_space<vmem>>, %arg2: memref<32x512xbf16, #tpu.memory_space<vmem>>, %arg3: memref<1x512xf32, #tpu.memory_space<vmem>>, %arg4: memref<512x256xbf16, #tpu.memory_space<vmem>>, %arg5: memref<1x256xf32, #tpu.memory_space<vmem>>, %arg6: memref<256x256xbf16, #tpu.memory_space<vmem>>, %arg7: memref<1x256xf32, #tpu.memory_space<vmem>>, %arg8: memref<8x256xf32, #tpu.memory_space<vmem>>) attributes {dimension_semantics = [#tpu.dimension_semantics<parallel>], iteration_bounds = array<i64: 1>, scalar_prefetch = 0 : i64, scratch_operands = 0 : i64, tpu.core_type = #tpu.core_type<tc>, window_params = [{transform_indices = @transform_0, window_bounds = array<i64: 8, 32>}, {pipeline_mode = #tpu.pipeline_mode<synchronous>, transform_indices = @transform_1, window_bounds = array<i64: 32, 512>}, {pipeline_mode = #tpu.pipeline_mode<synchronous>, transform_indices = @transform_2, window_bounds = array<i64: 1, 512>}, {pipeline_mode = #tpu.pipeline_mode<synchronous>, transform_indices = @transform_3, window_bounds = array<i64: 512, 256>}, {pipeline_mode = #tpu.pipeline_mode<synchronous>, transform_indices = @transform_4, window_bounds = array<i64: 1, 256>}, {pipeline_mode = #tpu.pipeline_mode<synchronous>, transform_indices = @transform_5, window_bounds = array<i64: 256, 256>}, {pipeline_mode = #tpu.pipeline_mode<synchronous>, transform_indices = @transform_6, window_bounds = array<i64: 1, 256>}, {transform_indices = @transform_7, window_bounds = array<i64: 8, 256>}]} {
    %c0 = arith.constant 0 : index
    %c0_0 = arith.constant 0 : index
    %0 = vector.load %arg1[%c0, %c0_0] : memref<8x32xbf16, #tpu.memory_space<vmem>>, vector<8x32xbf16>
    %c0_1 = arith.constant 0 : index
    %c0_2 = arith.constant 0 : index
    %1 = vector.load %arg2[%c0_1, %c0_2] : memref<32x512xbf16, #tpu.memory_space<vmem>>, vector<32x512xbf16>
    %cst = arith.constant dense<0.000000e+00> : vector<8x512xf32>
    %2 = tpu.matmul %0, %1, %cst {dimension_numbers = #tpu.dot_dimension_numbers<[1], [0], [0], [1], [0, 0, 1, 1], [], []>} : vector<8x32xbf16>, vector<32x512xbf16>, vector<8x512xf32> -> vector<8x512xf32>
    %c0_3 = arith.constant 0 : index
    %c0_4 = arith.constant 0 : index
    %3 = vector.load %arg3[%c0_3, %c0_4] : memref<1x512xf32, #tpu.memory_space<vmem>>, vector<1x512xf32>
    %4 = vector.broadcast %3 : vector<1x512xf32> to vector<8x512xf32>
    %5 = arith.addf %2, %4 : vector<8x512xf32>
    %cst_5 = arith.constant 0.000000e+00 : f32
    %6 = vector.broadcast %cst_5 : f32 to vector<8x512xf32>
    %7 = arith.maximumf %5, %6 : vector<8x512xf32>
    %8 = arith.truncf %7 : vector<8x512xf32> to vector<8x512xbf16>
    %c0_6 = arith.constant 0 : index
    %c0_7 = arith.constant 0 : index
    %9 = vector.load %arg4[%c0_6, %c0_7] : memref<512x256xbf16, #tpu.memory_space<vmem>>, vector<512x256xbf16>
    %cst_8 = arith.constant dense<0.000000e+00> : vector<8x256xf32>
    %10 = tpu.matmul %8, %9, %cst_8 {dimension_numbers = #tpu.dot_dimension_numbers<[1], [0], [0], [1], [0, 0, 1, 1], [], []>} : vector<8x512xbf16>, vector<512x256xbf16>, vector<8x256xf32> -> vector<8x256xf32>
    %c0_9 = arith.constant 0 : index
    %c0_10 = arith.constant 0 : index
    %11 = vector.load %arg5[%c0_9, %c0_10] : memref<1x256xf32, #tpu.memory_space<vmem>>, vector<1x256xf32>
    %12 = vector.broadcast %11 : vector<1x256xf32> to vector<8x256xf32>
    %13 = arith.addf %10, %12 : vector<8x256xf32>
    %cst_11 = arith.constant 0.000000e+00 : f32
    %14 = vector.broadcast %cst_11 : f32 to vector<8x256xf32>
    %15 = arith.maximumf %13, %14 : vector<8x256xf32>
    %16 = arith.truncf %15 : vector<8x256xf32> to vector<8x256xbf16>
    %c0_12 = arith.constant 0 : index
    %c0_13 = arith.constant 0 : index
    %17 = vector.load %arg6[%c0_12, %c0_13] : memref<256x256xbf16, #tpu.memory_space<vmem>>, vector<256x256xbf16>
    %cst_14 = arith.constant dense<0.000000e+00> : vector<8x256xf32>
    %18 = tpu.matmul %16, %17, %cst_14 {dimension_numbers = #tpu.dot_dimension_numbers<[1], [0], [0], [1], [0, 0, 1, 1], [], []>} : vector<8x256xbf16>, vector<256x256xbf16>, vector<8x256xf32> -> vector<8x256xf32>
    %c0_15 = arith.constant 0 : index
    %c0_16 = arith.constant 0 : index
    %19 = vector.load %arg7[%c0_15, %c0_16] : memref<1x256xf32, #tpu.memory_space<vmem>>, vector<1x256xf32>
    %20 = vector.broadcast %19 : vector<1x256xf32> to vector<8x256xf32>
    %21 = arith.addf %18, %20 : vector<8x256xf32>
    %c0_17 = arith.constant 0 : index
    %c0_18 = arith.constant 0 : index
    %22 = vector.load %arg8[%c0_17, %c0_18] : memref<8x256xf32, #tpu.memory_space<vmem>>, vector<8x256xf32>
    tpu.vector_store %arg8[%c0_17, %c0_18], %21 {strides = array<i32>} : memref<8x256xf32, #tpu.memory_space<vmem>>, vector<8x256xf32>,
    return
  }
  func.func @transform_0(%arg0: i32) -> (i32, i32) {
    %c0_i32 = arith.constant 0 : i32
    %c0_i32_0 = arith.constant 0 : i32
    return %arg0, %c0_i32 : i32, i32
  }
  func.func @transform_1(%arg0: i32) -> (i32, i32) {
    %c0_i32 = arith.constant 0 : i32
    %c0_i32_0 = arith.constant 0 : i32
    %c0_i32_1 = arith.constant 0 : i32
    return %c0_i32, %c0_i32_0 : i32, i32
  }
  func.func @transform_2(%arg0: i32) -> (i32, i32) {
    %c0_i32 = arith.constant 0 : i32
    %c0_i32_0 = arith.constant 0 : i32
    %c0_i32_1 = arith.constant 0 : i32
    return %c0_i32, %c0_i32_0 : i32, i32
  }
  func.func @transform_3(%arg0: i32) -> (i32, i32) {
    %c0_i32 = arith.constant 0 : i32
    %c0_i32_0 = arith.constant 0 : i32
    %c0_i32_1 = arith.constant 0 : i32
    return %c0_i32, %c0_i32_0 : i32, i32
  }
  func.func @transform_4(%arg0: i32) -> (i32, i32) {
    %c0_i32 = arith.constant 0 : i32
    %c0_i32_0 = arith.constant 0 : i32
    %c0_i32_1 = arith.constant 0 : i32
    return %c0_i32, %c0_i32_0 : i32, i32
  }
  func.func @transform_5(%arg0: i32) -> (i32, i32) {
    %c0_i32 = arith.constant 0 : i32
    %c0_i32_0 = arith.constant 0 : i32
    %c0_i32_1 = arith.constant 0 : i32
    return %c0_i32, %c0_i32_0 : i32, i32
  }
  func.func @transform_6(%arg0: i32) -> (i32, i32) {
    %c0_i32 = arith.constant 0 : i32
    %c0_i32_0 = arith.constant 0 : i32
    %c0_i32_1 = arith.constant 0 : i32
    return %c0_i32, %c0_i32_0 : i32, i32
  }
  func.func @transform_7(%arg0: i32) -> (i32, i32) {
    %c0_i32 = arith.constant 0 : i32
    %c0_i32_0 = arith.constant 0 : i32
    return %arg0, %c0_i32 : i32, i32
  }
}

</mosaic_0001>

<llo_original>
// kernel: resnet50fc_forward.1
$region0: #{resnet50fc_forward.1}
  #allocation0 [shape = 'u32[]', space=smem, size = 0x4, offset = 0x4, fixed_abs, tag = 'smem constant byte address 0x4 - core index']
  #allocation1 [shape = 'u32[72,128]{1,0:T(1,128)}', space=vmem, size = 0x9000, scoped, tag = 'internal scratch']
  %s0 = inlined_call_operand.vmem [shape: bf16[8,32], index: 0, kind: input, shape index: {}]
  %s1 = inlined_call_operand.vmem [shape: bf16[32,512], index: 1, kind: input, shape index: {}]
  %s2 = inlined_call_operand.vmem [shape: f32[1,512], index: 2, kind: input, shape index: {}]
  %s3 = inlined_call_operand.vmem [shape: bf16[512,256], index: 3, kind: input, shape index: {}]
  %s4 = inlined_call_operand.vmem [shape: f32[1,256], index: 4, kind: input, shape index: {}]
  %s5 = inlined_call_operand.vmem [shape: bf16[256,256], index: 5, kind: input, shape index: {}]
  %s6 = inlined_call_operand.vmem [shape: f32[1,256], index: 6, kind: input, shape index: {}]
  %s7 = inlined_call_operand.hbm [shape: f32[8,256], index: 7, kind: output, shape index: {}]
  %s8 = sld [smem:[#allocation0]]
  $region38: #{resnet50fc_forward.1} parent=0
    _
  %s10 = ssub.s32 1, %s8
  %s11 = scalar_select 0, %s10, %s8
  $region1: #{resnet50fc_forward.1} parent=0
    #allocation2 [shape = 'u8[8192]{0}', space=vmem, size = 0x2000, scoped, tag = 'output window, operand 0, single buffered']
    #allocation3 [shape = 's32[1]{0}', space=sflag, size = 0x4, scoped, tag = 'scoped memory for resnet50fc_forward.1']
    %12 = vsyncpa [#allocation3], 0
    // Predicated region
    $region2: #{resnet50fc_forward.1} parent=1 // pred_check
      _
    $region3: #{resnet50fc_forward.1} parent=1 // pred_check_branch
      %14 = sbr.rel (0) target = $region5
    $region4: #{resnet50fc_forward.1} parent=1 // pred_region
      _
    $region5: #{resnet50fc_forward.1} parent=1 // pred_fallthru
      _
    // Predicated region
    $region6: #{resnet50fc_forward.1} parent=1 // pred_check
      _
    $region7: #{resnet50fc_forward.1} parent=1 // pred_check_branch
      %16 = sbr.rel (0) target = $region9
    $region8: #{resnet50fc_forward.1} parent=1 // pred_region
      _
    $region9: #{resnet50fc_forward.1} parent=1 // pred_fallthru
      _
    // Predicated region
    $region10: #{resnet50fc_forward.1} parent=1 // pred_check
      _
    $region11: #{resnet50fc_forward.1} parent=1 // pred_check_branch
      %18 = sbr.rel (0) target = $region13
    $region12: #{resnet50fc_forward.1} parent=1 // pred_region
      _
    $region13: #{resnet50fc_forward.1} parent=1 // pred_fallthru
      _
    // Predicated region
    $region14: #{resnet50fc_forward.1} parent=1 // pred_check
      _
    $region15: #{resnet50fc_forward.1} parent=1 // pred_check_branch
      %20 = sbr.rel (0) target = $region17
    $region16: #{resnet50fc_forward.1} parent=1 // pred_region
      _
    $region17: #{resnet50fc_forward.1} parent=1 // pred_fallthru
      _
    // Predicated region
    $region18: #{resnet50fc_forward.1} parent=1 // pred_check
      _
    $region19: #{resnet50fc_forward.1} parent=1 // pred_check_branch
      %22 = sbr.rel (0) target = $region21
    $region20: #{resnet50fc_forward.1} parent=1 // pred_region
      _
    $region21: #{resnet50fc_forward.1} parent=1 // pred_fallthru
      _
    // Predicated region
    $region22: #{resnet50fc_forward.1} parent=1 // pred_check
      _
    $region23: #{resnet50fc_forward.1} parent=1 // pred_check_branch
      %24 = sbr.rel (0) target = $region25
    $region24: #{resnet50fc_forward.1} parent=1 // pred_region
      _
    $region25: #{resnet50fc_forward.1} parent=1 // pred_fallthru
      _
    // Predicated region
    $region26: #{resnet50fc_forward.1} parent=1 // pred_check
      _
    $region27: #{resnet50fc_forward.1} parent=1 // pred_check_branch
      %26 = sbr.rel (0) target = $region29
    $region28: #{resnet50fc_forward.1} parent=1 // pred_region
      _
    $region29: #{resnet50fc_forward.1} parent=1 // pred_fallthru
      _
    %v28 = vld [vmem:[%s0] sm:$0xf]
    %v29 = vld [vmem:[%s1] sm:$0xff]
    %v30 = vld [vmem:[%s1 + $0x8] sm:$0xff]
    %v31 = vld [vmem:[%s1 + $0x10] sm:$0xff]
    %v32 = vld [vmem:[%s1 + $0x18] sm:$0xff]
    %v33 = vld [vmem:[%s1 + $0x20] sm:$0xff]
    %v34 = vld [vmem:[%s1 + $0x28] sm:$0xff]
    %v35 = vld [vmem:[%s1 + $0x30] sm:$0xff]
    %v36 = vld [vmem:[%s1 + $0x38] sm:$0xff]
    %v37 = vld [vmem:[%s2] sm:$0xf]
    %v39 = vperm.slane %v37, 0
    %v40 = vperm.slane %v37, 1
    %v41 = vperm.slane %v37, 2
    %v42 = vperm.slane %v37, 3
    %v55 = vunpack.c.l.b16 %v29
    %v56 = vunpack.c.h.b16 %v29
    %v57 = vunpack.c.l.b16 %v30
    %v58 = vunpack.c.h.b16 %v30
    %v59 = vunpack.c.l.b16 %v31
    %v60 = vunpack.c.h.b16 %v31
    %v61 = vunpack.c.l.b16 %v32
    %v62 = vunpack.c.h.b16 %v32
    %v63 = vunpack.c.l.b16 %v33
    %v64 = vunpack.c.h.b16 %v33
    %v65 = vunpack.c.l.b16 %v34
    %v66 = vunpack.c.h.b16 %v34
    %v67 = vunpack.c.l.b16 %v35
    %v68 = vunpack.c.h.b16 %v35
    %v69 = vunpack.c.l.b16 %v36
    %v70 = vunpack.c.h.b16 %v36
    %v71 = vpack.c.b16 %v59, %v55
    %v72 = vpack.c.b16 %v60, %v56
    %v73 = vpack.c.b16 %v61, %v57
    %v74 = vpack.c.b16 %v62, %v58
    %v75 = vpack.c.b16 %v67, %v63
    %v76 = vpack.c.b16 %v68, %v64
    %v77 = vpack.c.b16 %v69, %v65
    %v78 = vpack.c.b16 %v70, %v66
    %vm87 = vcmask 261120
    %v89 = vsel %vm87, %v28, 0
    %91 = vmatpush.bf16.msra.mxu0 0
    %92 = vmatpush.bf16.msra.mxu0 0
    %93 = vmatpush.bf16.msra.mxu0 0
    %94 = vmatpush.bf16.msra.mxu0 0
    %95 = vmatpush.bf16.msra.mxu0 0
    %96 = vmatpush.bf16.msra.mxu0 0
    %97 = vmatpush.bf16.msra.mxu0 %v75
    %98 = vmatpush.bf16.msra.mxu0 %v71
    %99 = vmatmul.bf16.gmra.mxu0 %v89
    %v100 = vpop.f32.mrf.mxu0
    %v101 = vadd.f32 %v39, %v100
    %v102 = vpop.f32.mrf.mxu0
    %103 = vdwg.mxu0
    %104 = vmatpush.bf16.msra.mxu0 0
    %105 = vmatpush.bf16.msra.mxu0 0
    %106 = vmatpush.bf16.msra.mxu0 0
    %107 = vmatpush.bf16.msra.mxu0 0
    %108 = vmatpush.bf16.msra.mxu0 0
    %109 = vmatpush.bf16.msra.mxu0 0
    %110 = vmatpush.bf16.msra.mxu0 %v76
    %111 = vmatpush.bf16.msra.mxu0 %v72
    %112 = vmatmul.bf16.gmra.mxu0 %v89
    %v113 = vpop.f32.mrf.mxu0
    %v114 = vadd.f32 %v40, %v113
    %v115 = vpop.f32.mrf.mxu0
    %116 = vdwg.mxu0
    %117 = vmatpush.bf16.msra.mxu0 0
    %118 = vmatpush.bf16.msra.mxu0 0
    %119 = vmatpush.bf16.msra.mxu0 0
    %120 = vmatpush.bf16.msra.mxu0 0
    %121 = vmatpush.bf16.msra.mxu0 0
    %122 = vmatpush.bf16.msra.mxu0 0
    %123 = vmatpush.bf16.msra.mxu0 %v77
    %124 = vmatpush.bf16.msra.mxu0 %v73
    %125 = vmatmul.bf16.gmra.mxu0 %v89
    %v126 = vpop.f32.mrf.mxu0
    %v127 = vadd.f32 %v41, %v126
    %v128 = vpop.f32.mrf.mxu0
    %129 = vdwg.mxu0
    %130 = vmatpush.bf16.msra.mxu0 0
    %131 = vmatpush.bf16.msra.mxu0 0
    %132 = vmatpush.bf16.msra.mxu0 0
    %133 = vmatpush.bf16.msra.mxu0 0
    %134 = vmatpush.bf16.msra.mxu0 0
    %135 = vmatpush.bf16.msra.mxu0 0
    %136 = vmatpush.bf16.msra.mxu0 %v78
    %137 = vmatpush.bf16.msra.mxu0 %v74
    %138 = vmatmul.bf16.gmra.mxu0 %v89
    %v139 = vpop.f32.mrf.mxu0
    %v140 = vadd.f32 %v42, %v139
    %v141 = vpop.f32.mrf.mxu0
    %142 = vdwg.mxu0
    %v143 = vmax.f32 %v101, 0.0
    %v144 = vmax.f32 %v114, 0.0
    %v145 = vmax.f32 %v127, 0.0
    %v146 = vmax.f32 %v140, 0.0
    %v147 = vpack.c.bf16 %v143, %v143
    %v148 = vpack.c.bf16 %v144, %v144
    %v149 = vpack.c.bf16 %v145, %v145
    %v150 = vpack.c.bf16 %v146, %v146
    %v151 = vld [vmem:[%s3] sm:$0xff]
    %v152 = vld [vmem:[%s3 + $0x8] sm:$0xff]
    %v153 = vld [vmem:[%s3 + $0x10] sm:$0xff]
    %v154 = vld [vmem:[%s3 + $0x18] sm:$0xff]
    %v155 = vld [vmem:[%s3 + $0x20] sm:$0xff]
    %v156 = vld [vmem:[%s3 + $0x28] sm:$0xff]
    %v157 = vld [vmem:[%s3 + $0x30] sm:$0xff]
    %v158 = vld [vmem:[%s3 + $0x38] sm:$0xff]
    %v159 = vld [vmem:[%s3 + $0x40] sm:$0xff]
    %v160 = vld [vmem:[%s3 + $0x48] sm:$0xff]
    %v161 = vld [vmem:[%s3 + $0x50] sm:$0xff]
    %v162 = vld [vmem:[%s3 + $0x58] sm:$0xff]
    %v163 = vld [vmem:[%s3 + $0x60] sm:$0xff]
    %v164 = vld [vmem:[%s3 + $0x68] sm:$0xff]
    %v165 = vld [vmem:[%s3 + $0x70] sm:$0xff]
    %v166 = vld [vmem:[%s3 + $0x78] sm:$0xff]
    %v167 = vld [vmem:[%s3 + $0x80] sm:$0xff]
    %v168 = vld [vmem:[%s3 + $0x88] sm:$0xff]
    %v169 = vld [vmem:[%s3 + $0x90] sm:$0xff]
    %v170 = vld [vmem:[%s3 + $0x98] sm:$0xff]
    %v171 = vld [vmem:[%s3 + $0xa0] sm:$0xff]
    %v172 = vld [vmem:[%s3 + $0xa8] sm:$0xff]
    %v173 = vld [vmem:[%s3 + $0xb0] sm:$0xff]
    %v174 = vld [vmem:[%s3 + $0xb8] sm:$0xff]
    %v175 = vld [vmem:[%s3 + $0xc0] sm:$0xff]
    %v176 = vld [vmem:[%s3 + $0xc8] sm:$0xff]
    %v177 = vld [vmem:[%s3 + $0xd0] sm:$0xff]
    %v178 = vld [vmem:[%s3 + $0xd8] sm:$0xff]
    %v179 = vld [vmem:[%s3 + $0xe0] sm:$0xff]
    %v180 = vld [vmem:[%s3 + $0xe8] sm:$0xff]
    %v181 = vld [vmem:[%s3 + $0xf0] sm:$0xff]
    %v182 = vld [vmem:[%s3 + $0xf8] sm:$0xff]
    %v183 = vld [vmem:[%s3 + $0x100] sm:$0xff]
    %v184 = vld [vmem:[%s3 + $0x108] sm:$0xff]
    %v185 = vld [vmem:[%s3 + $0x110] sm:$0xff]
    %v186 = vld [vmem:[%s3 + $0x118] sm:$0xff]
    %v187 = vld [vmem:[%s3 + $0x120] sm:$0xff]
    %v188 = vld [vmem:[%s3 + $0x128] sm:$0xff]
    %v189 = vld [vmem:[%s3 + $0x130] sm:$0xff]
    %v190 = vld [vmem:[%s3 + $0x138] sm:$0xff]
    %v191 = vld [vmem:[%s3 + $0x140] sm:$0xff]
    %v192 = vld [vmem:[%s3 + $0x148] sm:$0xff]
    %v193 = vld [vmem:[%s3 + $0x150] sm:$0xff]
    %v194 = vld [vmem:[%s3 + $0x158] sm:$0xff]
    %v195 = vld [vmem:[%s3 + $0x160] sm:$0xff]
    %v196 = vld [vmem:[%s3 + $0x168] sm:$0xff]
    %v197 = vld [vmem:[%s3 + $0x170] sm:$0xff]
    %v198 = vld [vmem:[%s3 + $0x178] sm:$0xff]
    %v199 = vld [vmem:[%s3 + $0x180] sm:$0xff]
    %v200 = vld [vmem:[%s3 + $0x188] sm:$0xff]
    %v201 = vld [vmem:[%s3 + $0x190] sm:$0xff]
    %v202 = vld [vmem:[%s3 + $0x198] sm:$0xff]
    %v203 = vld [vmem:[%s3 + $0x1a0] sm:$0xff]
    %v204 = vld [vmem:[%s3 + $0x1a8] sm:$0xff]
    %v205 = vld [vmem:[%s3 + $0x1b0] sm:$0xff]
    %v206 = vld [vmem:[%s3 + $0x1b8] sm:$0xff]
    %v207 = vld [vmem:[%s3 + $0x1c0] sm:$0xff]
    %v208 = vld [vmem:[%s3 + $0x1c8] sm:$0xff]
    %v209 = vld [vmem:[%s3 + $0x1d0] sm:$0xff]
    %v210 = vld [vmem:[%s3 + $0x1d8] sm:$0xff]
    %v211 = vld [vmem:[%s3 + $0x1e0] sm:$0xff]
    %v212 = vld [vmem:[%s3 + $0x1e8] sm:$0xff]
    %v213 = vld [vmem:[%s3 + $0x1f0] sm:$0xff]
    %v214 = vld [vmem:[%s3 + $0x1f8] sm:$0xff]
    %v215 = vld [vmem:[%s4] sm:$0x3]
    %v217 = vperm.slane %v215, 0
    %v218 = vperm.slane %v215, 1
    %v285 = vunpack.c.l.b16 %v151
    %v286 = vunpack.c.h.b16 %v151
    %v287 = vunpack.c.l.b16 %v152
    %v288 = vunpack.c.h.b16 %v152
    %v289 = vunpack.c.l.b16 %v153
    %v290 = vunpack.c.h.b16 %v153
    %v291 = vunpack.c.l.b16 %v154
    %v292 = vunpack.c.h.b16 %v154
    %v293 = vunpack.c.l.b16 %v155
    %v294 = vunpack.c.h.b16 %v155
    %v295 = vunpack.c.l.b16 %v156
    %v296 = vunpack.c.h.b16 %v156
    %v297 = vunpack.c.l.b16 %v157
    %v298 = vunpack.c.h.b16 %v157
    %v299 = vunpack.c.l.b16 %v158
    %v300 = vunpack.c.h.b16 %v158
    %v301 = vunpack.c.l.b16 %v159
    %v302 = vunpack.c.h.b16 %v159
    %v303 = vunpack.c.l.b16 %v160
    %v304 = vunpack.c.h.b16 %v160
    %v305 = vunpack.c.l.b16 %v161
    %v306 = vunpack.c.h.b16 %v161
    %v307 = vunpack.c.l.b16 %v162
    %v308 = vunpack.c.h.b16 %v162
    %v309 = vunpack.c.l.b16 %v163
    %v310 = vunpack.c.h.b16 %v163
    %v311 = vunpack.c.l.b16 %v164
    %v312 = vunpack.c.h.b16 %v164
    %v313 = vunpack.c.l.b16 %v165
    %v314 = vunpack.c.h.b16 %v165
    %v315 = vunpack.c.l.b16 %v166
    %v316 = vunpack.c.h.b16 %v166
    %v317 = vunpack.c.l.b16 %v167
    %v318 = vunpack.c.h.b16 %v167
    %v319 = vunpack.c.l.b16 %v168
    %v320 = vunpack.c.h.b16 %v168
    %v321 = vunpack.c.l.b16 %v169
    %v322 = vunpack.c.h.b16 %v169
    %v323 = vunpack.c.l.b16 %v170
    %v324 = vunpack.c.h.b16 %v170
    %v325 = vunpack.c.l.b16 %v171
    %v326 = vunpack.c.h.b16 %v171
    %v327 = vunpack.c.l.b16 %v172
    %v328 = vunpack.c.h.b16 %v172
    %v329 = vunpack.c.l.b16 %v173
    %v330 = vunpack.c.h.b16 %v173
    %v331 = vunpack.c.l.b16 %v174
    %v332 = vunpack.c.h.b16 %v174
    %v333 = vunpack.c.l.b16 %v175
    %v334 = vunpack.c.h.b16 %v175
    %v335 = vunpack.c.l.b16 %v176
    %v336 = vunpack.c.h.b16 %v176
    %v337 = vunpack.c.l.b16 %v177
    %v338 = vunpack.c.h.b16 %v177
    %v339 = vunpack.c.l.b16 %v178
    %v340 = vunpack.c.h.b16 %v178
    %v341 = vunpack.c.l.b16 %v179
    %v342 = vunpack.c.h.b16 %v179
    %v343 = vunpack.c.l.b16 %v180
    %v344 = vunpack.c.h.b16 %v180
    %v345 = vunpack.c.l.b16 %v181
    %v346 = vunpack.c.h.b16 %v181
    %v347 = vunpack.c.l.b16 %v182
    %v348 = vunpack.c.h.b16 %v182
    %v349 = vunpack.c.l.b16 %v183
    %v350 = vunpack.c.h.b16 %v183
    %v351 = vunpack.c.l.b16 %v184
    %v352 = vunpack.c.h.b16 %v184
    %v353 = vunpack.c.l.b16 %v185
    %v354 = vunpack.c.h.b16 %v185
    %v355 = vunpack.c.l.b16 %v186
    %v356 = vunpack.c.h.b16 %v186
    %v357 = vunpack.c.l.b16 %v187
    %v358 = vunpack.c.h.b16 %v187
    %v359 = vunpack.c.l.b16 %v188
    %v360 = vunpack.c.h.b16 %v188
    %v361 = vunpack.c.l.b16 %v189
    %v362 = vunpack.c.h.b16 %v189
    %v363 = vunpack.c.l.b16 %v190
    %v364 = vunpack.c.h.b16 %v190
    %v365 = vunpack.c.l.b16 %v191
    %v366 = vunpack.c.h.b16 %v191
    %v367 = vunpack.c.l.b16 %v192
    %v368 = vunpack.c.h.b16 %v192
    %v369 = vunpack.c.l.b16 %v193
    %v370 = vunpack.c.h.b16 %v193
    %v371 = vunpack.c.l.b16 %v194
    %v372 = vunpack.c.h.b16 %v194
    %v373 = vunpack.c.l.b16 %v195
    %v374 = vunpack.c.h.b16 %v195
    %v375 = vunpack.c.l.b16 %v196
    %v376 = vunpack.c.h.b16 %v196
    %v377 = vunpack.c.l.b16 %v197
    %v378 = vunpack.c.h.b16 %v197
    %v379 = vunpack.c.l.b16 %v198
    %v380 = vunpack.c.h.b16 %v198
    %v381 = vunpack.c.l.b16 %v199
    %v382 = vunpack.c.h.b16 %v199
    %v383 = vunpack.c.l.b16 %v200
    %v384 = vunpack.c.h.b16 %v200
    %v385 = vunpack.c.l.b16 %v201
    %v386 = vunpack.c.h.b16 %v201
    %v387 = vunpack.c.l.b16 %v202
    %v388 = vunpack.c.h.b16 %v202
    %v389 = vunpack.c.l.b16 %v203
    %v390 = vunpack.c.h.b16 %v203
    %v391 = vunpack.c.l.b16 %v204
    %v392 = vunpack.c.h.b16 %v204
    %v393 = vunpack.c.l.b16 %v205
    %v394 = vunpack.c.h.b16 %v205
    %v395 = vunpack.c.l.b16 %v206
    %v396 = vunpack.c.h.b16 %v206
    %v397 = vunpack.c.l.b16 %v207
    %v398 = vunpack.c.h.b16 %v207
    %v399 = vunpack.c.l.b16 %v208
    %v400 = vunpack.c.h.b16 %v208
    %v401 = vunpack.c.l.b16 %v209
    %v402 = vunpack.c.h.b16 %v209
    %v403 = vunpack.c.l.b16 %v210
    %v404 = vunpack.c.h.b16 %v210
    %v405 = vunpack.c.l.b16 %v211
    %v406 = vunpack.c.h.b16 %v211
    %v407 = vunpack.c.l.b16 %v212
    %v408 = vunpack.c.h.b16 %v212
    %v409 = vunpack.c.l.b16 %v213
    %v410 = vunpack.c.h.b16 %v213
    %v411 = vunpack.c.l.b16 %v214
    %v412 = vunpack.c.h.b16 %v214
    %v413 = vpack.c.b16 %v287, %v285
    %v414 = vpack.c.b16 %v288, %v286
    %v415 = vpack.c.b16 %v291, %v289
    %v416 = vpack.c.b16 %v292, %v290
    %v417 = vpack.c.b16 %v295, %v293
    %v418 = vpack.c.b16 %v296, %v294
    %v419 = vpack.c.b16 %v299, %v297
    %v420 = vpack.c.b16 %v300, %v298
    %v421 = vpack.c.b16 %v303, %v301
    %v422 = vpack.c.b16 %v304, %v302
    %v423 = vpack.c.b16 %v307, %v305
    %v424 = vpack.c.b16 %v308, %v306
    %v425 = vpack.c.b16 %v311, %v309
    %v426 = vpack.c.b16 %v312, %v310
    %v427 = vpack.c.b16 %v315, %v313
    %v428 = vpack.c.b16 %v316, %v314
    %v429 = vpack.c.b16 %v319, %v317
    %v430 = vpack.c.b16 %v320, %v318
    %v431 = vpack.c.b16 %v323, %v321
    %v432 = vpack.c.b16 %v324, %v322
    %v433 = vpack.c.b16 %v327, %v325
    %v434 = vpack.c.b16 %v328, %v326
    %v435 = vpack.c.b16 %v331, %v329
    %v436 = vpack.c.b16 %v332, %v330
    %v437 = vpack.c.b16 %v335, %v333
    %v438 = vpack.c.b16 %v336, %v334
    %v439 = vpack.c.b16 %v339, %v337
    %v440 = vpack.c.b16 %v340, %v338
    %v441 = vpack.c.b16 %v343, %v341
    %v442 = vpack.c.b16 %v344, %v342
    %v443 = vpack.c.b16 %v347, %v345
    %v444 = vpack.c.b16 %v348, %v346
    %v445 = vpack.c.b16 %v351, %v349
    %v446 = vpack.c.b16 %v352, %v350
    %v447 = vpack.c.b16 %v355, %v353
    %v448 = vpack.c.b16 %v356, %v354
    %v449 = vpack.c.b16 %v359, %v357
    %v450 = vpack.c.b16 %v360, %v358
    %v451 = vpack.c.b16 %v363, %v361
    %v452 = vpack.c.b16 %v364, %v362
    %v453 = vpack.c.b16 %v367, %v365
    %v454 = vpack.c.b16 %v368, %v366
    %v455 = vpack.c.b16 %v371, %v369
    %v456 = vpack.c.b16 %v372, %v370
    %v457 = vpack.c.b16 %v375, %v373
    %v458 = vpack.c.b16 %v376, %v374
    %v459 = vpack.c.b16 %v379, %v377
    %v460 = vpack.c.b16 %v380, %v378
    %v461 = vpack.c.b16 %v383, %v381
    %v462 = vpack.c.b16 %v384, %v382
    %v463 = vpack.c.b16 %v387, %v385
    %v464 = vpack.c.b16 %v388, %v386
    %v465 = vpack.c.b16 %v391, %v389
    %v466 = vpack.c.b16 %v392, %v390
    %v467 = vpack.c.b16 %v395, %v393
    %v468 = vpack.c.b16 %v396, %v394
    %v469 = vpack.c.b16 %v399, %v397
    %v470 = vpack.c.b16 %v400, %v398
    %v471 = vpack.c.b16 %v403, %v401
    %v472 = vpack.c.b16 %v404, %v402
    %v473 = vpack.c.b16 %v407, %v405
    %v474 = vpack.c.b16 %v408, %v406
    %v475 = vpack.c.b16 %v411, %v409
    %v476 = vpack.c.b16 %v412, %v410
    %541 = vmatpush.bf16.msra.mxu0 %v427
    %542 = vmatpush.bf16.msra.mxu0 %v425
    %543 = vmatpush.bf16.msra.mxu0 %v423
    %544 = vmatpush.bf16.msra.mxu0 %v421
    %545 = vmatpush.bf16.msra.mxu0 %v419
    %546 = vmatpush.bf16.msra.mxu0 %v417
    %547 = vmatpush.bf16.msra.mxu0 %v415
    %548 = vmatpush.bf16.msra.mxu0 %v413
    %549 = vmatmul.bf16.gmra.mxu0 %v147
    %v550 = vpop.f32.mrf.mxu0
    %v551 = vadd.f32 %v217, %v550
    %v552 = vpop.f32.mrf.mxu0
    %553 = vdwg.mxu0
    %554 = vmatpush.bf16.msra.mxu0 %v443
    %555 = vmatpush.bf16.msra.mxu0 %v441
    %556 = vmatpush.bf16.msra.mxu0 %v439
    %557 = vmatpush.bf16.msra.mxu0 %v437
    %558 = vmatpush.bf16.msra.mxu0 %v435
    %559 = vmatpush.bf16.msra.mxu0 %v433
    %560 = vmatpush.bf16.msra.mxu0 %v431
    %561 = vmatpush.bf16.msra.mxu0 %v429
    %562 = vmatmul.bf16.gmra.mxu0 %v148
    %v563 = vpop.f32.mrf.mxu0
    %v564 = vadd.f32 %v551, %v563
    %v565 = vpop.f32.mrf.mxu0
    %566 = vdwg.mxu0
    %567 = vmatpush.bf16.msra.mxu0 %v459
    %568 = vmatpush.bf16.msra.mxu0 %v457
    %569 = vmatpush.bf16.msra.mxu0 %v455
    %570 = vmatpush.bf16.msra.mxu0 %v453
    %571 = vmatpush.bf16.msra.mxu0 %v451
    %572 = vmatpush.bf16.msra.mxu0 %v449
    %573 = vmatpush.bf16.msra.mxu0 %v447
    %574 = vmatpush.bf16.msra.mxu0 %v445
    %575 = vmatmul.bf16.gmra.mxu0 %v149
    %v576 = vpop.f32.mrf.mxu0
    %v577 = vadd.f32 %v564, %v576
    %v578 = vpop.f32.mrf.mxu0
    %579 = vdwg.mxu0
    %580 = vmatpush.bf16.msra.mxu0 %v475
    %581 = vmatpush.bf16.msra.mxu0 %v473
    %582 = vmatpush.bf16.msra.mxu0 %v471
    %583 = vmatpush.bf16.msra.mxu0 %v469
    %584 = vmatpush.bf16.msra.mxu0 %v467
    %585 = vmatpush.bf16.msra.mxu0 %v465
    %586 = vmatpush.bf16.msra.mxu0 %v463
    %587 = vmatpush.bf16.msra.mxu0 %v461
    %588 = vmatmul.bf16.gmra.mxu0 %v150
    %v589 = vpop.f32.mrf.mxu0
    %v590 = vadd.f32 %v577, %v589
    %v591 = vpop.f32.mrf.mxu0
    %592 = vdwg.mxu0
    %593 = vmatpush.bf16.msra.mxu0 %v428
    %594 = vmatpush.bf16.msra.mxu0 %v426
    %595 = vmatpush.bf16.msra.mxu0 %v424
    %596 = vmatpush.bf16.msra.mxu0 %v422
    %597 = vmatpush.bf16.msra.mxu0 %v420
    %598 = vmatpush.bf16.msra.mxu0 %v418
    %599 = vmatpush.bf16.msra.mxu0 %v416
    %600 = vmatpush.bf16.msra.mxu0 %v414
    %601 = vmatmul.bf16.gmra.mxu0 %v147
    %v602 = vpop.f32.mrf.mxu0
    %v603 = vadd.f32 %v218, %v602
    %v604 = vpop.f32.mrf.mxu0
    %605 = vdwg.mxu0
    %606 = vmatpush.bf16.msra.mxu0 %v444
    %607 = vmatpush.bf16.msra.mxu0 %v442
    %608 = vmatpush.bf16.msra.mxu0 %v440
    %609 = vmatpush.bf16.msra.mxu0 %v438
    %610 = vmatpush.bf16.msra.mxu0 %v436
    %611 = vmatpush.bf16.msra.mxu0 %v434
    %612 = vmatpush.bf16.msra.mxu0 %v432
    %613 = vmatpush.bf16.msra.mxu0 %v430
    %614 = vmatmul.bf16.gmra.mxu0 %v148
    %v615 = vpop.f32.mrf.mxu0
    %v616 = vadd.f32 %v603, %v615
    %v617 = vpop.f32.mrf.mxu0
    %618 = vdwg.mxu0
    %619 = vmatpush.bf16.msra.mxu0 %v460
    %620 = vmatpush.bf16.msra.mxu0 %v458
    %621 = vmatpush.bf16.msra.mxu0 %v456
    %622 = vmatpush.bf16.msra.mxu0 %v454
    %623 = vmatpush.bf16.msra.mxu0 %v452
    %624 = vmatpush.bf16.msra.mxu0 %v450
    %625 = vmatpush.bf16.msra.mxu0 %v448
    %626 = vmatpush.bf16.msra.mxu0 %v446
    %627 = vmatmul.bf16.gmra.mxu0 %v149
    %v628 = vpop.f32.mrf.mxu0
    %v629 = vadd.f32 %v616, %v628
    %v630 = vpop.f32.mrf.mxu0
    %631 = vdwg.mxu0
    %632 = vmatpush.bf16.msra.mxu0 %v476
    %633 = vmatpush.bf16.msra.mxu0 %v474
    %634 = vmatpush.bf16.msra.mxu0 %v472
    %635 = vmatpush.bf16.msra.mxu0 %v470
    %636 = vmatpush.bf16.msra.mxu0 %v468
    %637 = vmatpush.bf16.msra.mxu0 %v466
    %638 = vmatpush.bf16.msra.mxu0 %v464
    %639 = vmatpush.bf16.msra.mxu0 %v462
    %640 = vmatmul.bf16.gmra.mxu0 %v150
    %v641 = vpop.f32.mrf.mxu0
    %v642 = vadd.f32 %v629, %v641
    %v643 = vpop.f32.mrf.mxu0
    %644 = vdwg.mxu0
    %v645 = vmax.f32 %v590, 0.0
    %v646 = vmax.f32 %v642, 0.0
    %v647 = vpack.c.bf16 %v645, %v645
    %v648 = vpack.c.bf16 %v646, %v646
    %v649 = vld [vmem:[%s5] sm:$0xff]
    %v650 = vld [vmem:[%s5 + $0x8] sm:$0xff]
    %v651 = vld [vmem:[%s5 + $0x10] sm:$0xff]
    %v652 = vld [vmem:[%s5 + $0x18] sm:$0xff]
    %v653 = vld [vmem:[%s5 + $0x20] sm:$0xff]
    %v654 = vld [vmem:[%s5 + $0x28] sm:$0xff]
    %v655 = vld [vmem:[%s5 + $0x30] sm:$0xff]
    %v656 = vld [vmem:[%s5 + $0x38] sm:$0xff]
    %v657 = vld [vmem:[%s5 + $0x40] sm:$0xff]
    %v658 = vld [vmem:[%s5 + $0x48] sm:$0xff]
    %v659 = vld [vmem:[%s5 + $0x50] sm:$0xff]
    %v660 = vld [vmem:[%s5 + $0x58] sm:$0xff]
    %v661 = vld [vmem:[%s5 + $0x60] sm:$0xff]
    %v662 = vld [vmem:[%s5 + $0x68] sm:$0xff]
    %v663 = vld [vmem:[%s5 + $0x70] sm:$0xff]
    %v664 = vld [vmem:[%s5 + $0x78] sm:$0xff]
    %v665 = vld [vmem:[%s5 + $0x80] sm:$0xff]
    %v666 = vld [vmem:[%s5 + $0x88] sm:$0xff]
    %v667 = vld [vmem:[%s5 + $0x90] sm:$0xff]
    %v668 = vld [vmem:[%s5 + $0x98] sm:$0xff]
    %v669 = vld [vmem:[%s5 + $0xa0] sm:$0xff]
    %v670 = vld [vmem:[%s5 + $0xa8] sm:$0xff]
    %v671 = vld [vmem:[%s5 + $0xb0] sm:$0xff]
    %v672 = vld [vmem:[%s5 + $0xb8] sm:$0xff]
    %v673 = vld [vmem:[%s5 + $0xc0] sm:$0xff]
    %v674 = vld [vmem:[%s5 + $0xc8] sm:$0xff]
    %v675 = vld [vmem:[%s5 + $0xd0] sm:$0xff]
    %v676 = vld [vmem:[%s5 + $0xd8] sm:$0xff]
    %v677 = vld [vmem:[%s5 + $0xe0] sm:$0xff]
    %v678 = vld [vmem:[%s5 + $0xe8] sm:$0xff]
    %v679 = vld [vmem:[%s5 + $0xf0] sm:$0xff]
    %v680 = vld [vmem:[%s5 + $0xf8] sm:$0xff]
    %v681 = vld [vmem:[%s6] sm:$0x3]
    %v683 = vperm.slane %v681, 0
    %v684 = vperm.slane %v681, 1
    %v719 = vunpack.c.l.b16 %v649
    %v720 = vunpack.c.h.b16 %v649
    %v721 = vunpack.c.l.b16 %v650
    %v722 = vunpack.c.h.b16 %v650
    %v723 = vunpack.c.l.b16 %v651
    %v724 = vunpack.c.h.b16 %v651
    %v725 = vunpack.c.l.b16 %v652
    %v726 = vunpack.c.h.b16 %v652
    %v727 = vunpack.c.l.b16 %v653
    %v728 = vunpack.c.h.b16 %v653
    %v729 = vunpack.c.l.b16 %v654
    %v730 = vunpack.c.h.b16 %v654
    %v731 = vunpack.c.l.b16 %v655
    %v732 = vunpack.c.h.b16 %v655
    %v733 = vunpack.c.l.b16 %v656
    %v734 = vunpack.c.h.b16 %v656
    %v735 = vunpack.c.l.b16 %v657
    %v736 = vunpack.c.h.b16 %v657
    %v737 = vunpack.c.l.b16 %v658
    %v738 = vunpack.c.h.b16 %v658
    %v739 = vunpack.c.l.b16 %v659
    %v740 = vunpack.c.h.b16 %v659
    %v741 = vunpack.c.l.b16 %v660
    %v742 = vunpack.c.h.b16 %v660
    %v743 = vunpack.c.l.b16 %v661
    %v744 = vunpack.c.h.b16 %v661
    %v745 = vunpack.c.l.b16 %v662
    %v746 = vunpack.c.h.b16 %v662
    %v747 = vunpack.c.l.b16 %v663
    %v748 = vunpack.c.h.b16 %v663
    %v749 = vunpack.c.l.b16 %v664
    %v750 = vunpack.c.h.b16 %v664
    %v751 = vunpack.c.l.b16 %v665
    %v752 = vunpack.c.h.b16 %v665
    %v753 = vunpack.c.l.b16 %v666
    %v754 = vunpack.c.h.b16 %v666
    %v755 = vunpack.c.l.b16 %v667
    %v756 = vunpack.c.h.b16 %v667
    %v757 = vunpack.c.l.b16 %v668
    %v758 = vunpack.c.h.b16 %v668
    %v759 = vunpack.c.l.b16 %v669
    %v760 = vunpack.c.h.b16 %v669
    %v761 = vunpack.c.l.b16 %v670
    %v762 = vunpack.c.h.b16 %v670
    %v763 = vunpack.c.l.b16 %v671
    %v764 = vunpack.c.h.b16 %v671
    %v765 = vunpack.c.l.b16 %v672
    %v766 = vunpack.c.h.b16 %v672
    %v767 = vunpack.c.l.b16 %v673
    %v768 = vunpack.c.h.b16 %v673
    %v769 = vunpack.c.l.b16 %v674
    %v770 = vunpack.c.h.b16 %v674
    %v771 = vunpack.c.l.b16 %v675
    %v772 = vunpack.c.h.b16 %v675
    %v773 = vunpack.c.l.b16 %v676
    %v774 = vunpack.c.h.b16 %v676
    %v775 = vunpack.c.l.b16 %v677
    %v776 = vunpack.c.h.b16 %v677
    %v777 = vunpack.c.l.b16 %v678
    %v778 = vunpack.c.h.b16 %v678
    %v779 = vunpack.c.l.b16 %v679
    %v780 = vunpack.c.h.b16 %v679
    %v781 = vunpack.c.l.b16 %v680
    %v782 = vunpack.c.h.b16 %v680
    %v783 = vpack.c.b16 %v721, %v719
    %v784 = vpack.c.b16 %v722, %v720
    %v785 = vpack.c.b16 %v725, %v723
    %v786 = vpack.c.b16 %v726, %v724
    %v787 = vpack.c.b16 %v729, %v727
    %v788 = vpack.c.b16 %v730, %v728
    %v789 = vpack.c.b16 %v733, %v731
    %v790 = vpack.c.b16 %v734, %v732
    %v791 = vpack.c.b16 %v737, %v735
    %v792 = vpack.c.b16 %v738, %v736
    %v793 = vpack.c.b16 %v741, %v739
    %v794 = vpack.c.b16 %v742, %v740
    %v795 = vpack.c.b16 %v745, %v743
    %v796 = vpack.c.b16 %v746, %v744
    %v797 = vpack.c.b16 %v749, %v747
    %v798 = vpack.c.b16 %v750, %v748
    %v799 = vpack.c.b16 %v753, %v751
    %v800 = vpack.c.b16 %v754, %v752
    %v801 = vpack.c.b16 %v757, %v755
    %v802 = vpack.c.b16 %v758, %v756
    %v803 = vpack.c.b16 %v761, %v759
    %v804 = vpack.c.b16 %v762, %v760
    %v805 = vpack.c.b16 %v765, %v763
    %v806 = vpack.c.b16 %v766, %v764
    %v807 = vpack.c.b16 %v769, %v767
    %v808 = vpack.c.b16 %v770, %v768
    %v809 = vpack.c.b16 %v773, %v771
    %v810 = vpack.c.b16 %v774, %v772
    %v811 = vpack.c.b16 %v777, %v775
    %v812 = vpack.c.b16 %v778, %v776
    %v813 = vpack.c.b16 %v781, %v779
    %v814 = vpack.c.b16 %v782, %v780
    %847 = vmatpush.bf16.msra.mxu0 %v797
    %848 = vmatpush.bf16.msra.mxu0 %v795
    %849 = vmatpush.bf16.msra.mxu0 %v793
    %850 = vmatpush.bf16.msra.mxu0 %v791
    %851 = vmatpush.bf16.msra.mxu0 %v789
    %852 = vmatpush.bf16.msra.mxu0 %v787
    %853 = vmatpush.bf16.msra.mxu0 %v785
    %854 = vmatpush.bf16.msra.mxu0 %v783
    %855 = vmatmul.bf16.gmra.mxu0 %v647
    %v856 = vpop.f32.mrf.mxu0
    %v857 = vadd.f32 %v683, %v856
    %v858 = vpop.f32.mrf.mxu0
    %859 = vdwg.mxu0
    %860 = vmatpush.bf16.msra.mxu0 %v813
    %861 = vmatpush.bf16.msra.mxu0 %v811
    %862 = vmatpush.bf16.msra.mxu0 %v809
    %863 = vmatpush.bf16.msra.mxu0 %v807
    %864 = vmatpush.bf16.msra.mxu0 %v805
    %865 = vmatpush.bf16.msra.mxu0 %v803
    %866 = vmatpush.bf16.msra.mxu0 %v801
    %867 = vmatpush.bf16.msra.mxu0 %v799
    %868 = vmatmul.bf16.gmra.mxu0 %v648
    %v869 = vpop.f32.mrf.mxu0
    %v870 = vadd.f32 %v857, %v869
    %v871 = vpop.f32.mrf.mxu0
    %872 = vdwg.mxu0
    %873 = vmatpush.bf16.msra.mxu0 %v798
    %874 = vmatpush.bf16.msra.mxu0 %v796
    %875 = vmatpush.bf16.msra.mxu0 %v794
    %876 = vmatpush.bf16.msra.mxu0 %v792
    %877 = vmatpush.bf16.msra.mxu0 %v790
    %878 = vmatpush.bf16.msra.mxu0 %v788
    %879 = vmatpush.bf16.msra.mxu0 %v786
    %880 = vmatpush.bf16.msra.mxu0 %v784
    %881 = vmatmul.bf16.gmra.mxu0 %v647
    %v882 = vpop.f32.mrf.mxu0
    %v883 = vadd.f32 %v684, %v882
    %v884 = vpop.f32.mrf.mxu0
    %885 = vdwg.mxu0
    %886 = vmatpush.bf16.msra.mxu0 %v814
    %887 = vmatpush.bf16.msra.mxu0 %v812
    %888 = vmatpush.bf16.msra.mxu0 %v810
    %889 = vmatpush.bf16.msra.mxu0 %v808
    %890 = vmatpush.bf16.msra.mxu0 %v806
    %891 = vmatpush.bf16.msra.mxu0 %v804
    %892 = vmatpush.bf16.msra.mxu0 %v802
    %893 = vmatpush.bf16.msra.mxu0 %v800
    %894 = vmatmul.bf16.gmra.mxu0 %v648
    %v895 = vpop.f32.mrf.mxu0
    %v896 = vadd.f32 %v883, %v895
    %v897 = vpop.f32.mrf.mxu0
    %898 = vdwg.mxu0
    %899 = vst [vmem:[#allocation2] sm:$0xff] %v870
    %900 = vst [vmem:[#allocation2 + $0x8] sm:$0xff] %v896
    // Predicated region
    $region30: #{resnet50fc_forward.1} parent=1 // pred_check
      _
    $region31: #{resnet50fc_forward.1} parent=1 // pred_check_branch
      %902 = sbr.rel (0) target = $region33
    $region32: #{resnet50fc_forward.1} parent=1 // pred_region
      %904 = vsyncadd [#allocation3], 0
      %s906 = sshll.u32 [#allocation2], 4
      %s907 = int_to_ptr.vmem [resolvable:$true] %s906
      %s908 = sshll.u32 %s7, 4
      %s909 = int_to_ptr.hbm [resolvable:$true] %s908
      %911 = dma.vmem_to_hbm [thread:$0]  %s907, 256, %s909, [#allocation3]
    $region33: #{resnet50fc_forward.1} parent=1 // pred_fallthru
      _
    // Predicated region
    $region34: #{resnet50fc_forward.1} parent=1 // pred_check
      _
    $region35: #{resnet50fc_forward.1} parent=1 // pred_check_branch
      %913 = sbr.rel (0) target = $region37
    $region36: #{resnet50fc_forward.1} parent=1 // pred_region
      %915 = dma.done [#allocation3], 256
    $region37: #{resnet50fc_forward.1} parent=1 // pred_fallthru
      _
    %916 = vsyncpa [#allocation3], 1

// kernel: resnet50fc_forward.1
$region0: #{resnet50fc_forward.1}
  #allocation0 [shape = 'u32[]', space=smem, size = 0x4, offset = 0x4, fixed_abs, tag = 'smem constant byte address 0x4 - core index']
  #allocation1 [shape = 'u32[72,128]{1,0:T(1,128)}', space=vmem, size = 0x9000, scoped, tag = 'internal scratch']
  %s0 = inlined_call_operand.vmem [shape: bf16[8,32], index: 0, kind: input, shape index: {}]
  %s1 = inlined_call_operand.vmem [shape: bf16[32,512], index: 1, kind: input, shape index: {}]
  %s2 = inlined_call_operand.vmem [shape: f32[1,512], index: 2, kind: input, shape index: {}]
  %s3 = inlined_call_operand.vmem [shape: bf16[512,256], index: 3, kind: input, shape index: {}]
  %s4 = inlined_call_operand.vmem [shape: f32[1,256], index: 4, kind: input, shape index: {}]
  %s5 = inlined_call_operand.vmem [shape: bf16[256,256], index: 5, kind: input, shape index: {}]
  %s6 = inlined_call_operand.vmem [shape: f32[1,256], index: 6, kind: input, shape index: {}]
  %s7 = inlined_call_operand.hbm [shape: f32[8,256], index: 7, kind: output, shape index: {}]
  %s8 = sld [smem:[#allocation0]]
  $region38: #{resnet50fc_forward.1} parent=0
    _
  %s10 = ssub.s32 1, %s8
  %s11 = scalar_select 0, %s10, %s8
  $region1: #{resnet50fc_forward.1} parent=0
    #allocation2 [shape = 'u8[8192]{0}', space=vmem, size = 0x2000, scoped, tag = 'output window, operand 0, single buffered']
    #allocation3 [shape = 's32[1]{0}', space=sflag, size = 0x4, scoped, tag = 'scoped memory for resnet50fc_forward.1']
    %12 = vsyncpa [#allocation3], 0
    // Predicated region
    $region2: #{resnet50fc_forward.1} parent=1 // pred_check
      _
    $region3: #{resnet50fc_forward.1} parent=1 // pred_check_branch
      %14 = sbr.rel (0) target = $region5
    $region4: #{resnet50fc_forward.1} parent=1 // pred_region
      _
    $region5: #{resnet50fc_forward.1} parent=1 // pred_fallthru
      _
    // Predicated region
    $region6: #{resnet50fc_forward.1} parent=1 // pred_check
      _
    $region7: #{resnet50fc_forward.1} parent=1 // pred_check_branch
      %16 = sbr.rel (0) target = $region9
    $region8: #{resnet50fc_forward.1} parent=1 // pred_region
      _
    $region9: #{resnet50fc_forward.1} parent=1 // pred_fallthru
      _
    // Predicated region
    $region10: #{resnet50fc_forward.1} parent=1 // pred_check
      _
    $region11: #{resnet50fc_forward.1} parent=1 // pred_check_branch
      %18 = sbr.rel (0) target = $region13
    $region12: #{resnet50fc_forward.1} parent=1 // pred_region
      _
    $region13: #{resnet50fc_forward.1} parent=1 // pred_fallthru
      _
    // Predicated region
    $region14: #{resnet50fc_forward.1} parent=1 // pred_check
      _
    $region15: #{resnet50fc_forward.1} parent=1 // pred_check_branch
      %20 = sbr.rel (0) target = $region17
    $region16: #{resnet50fc_forward.1} parent=1 // pred_region
      _
    $region17: #{resnet50fc_forward.1} parent=1 // pred_fallthru
      _
    // Predicated region
    $region18: #{resnet50fc_forward.1} parent=1 // pred_check
      _
    $region19: #{resnet50fc_forward.1} parent=1 // pred_check_branch
      %22 = sbr.rel (0) target = $region21
    $region20: #{resnet50fc_forward.1} parent=1 // pred_region
      _
    $region21: #{resnet50fc_forward.1} parent=1 // pred_fallthru
      _
    // Predicated region
    $region22: #{resnet50fc_forward.1} parent=1 // pred_check
      _
    $region23: #{resnet50fc_forward.1} parent=1 // pred_check_branch
      %24 = sbr.rel (0) target = $region25
    $region24: #{resnet50fc_forward.1} parent=1 // pred_region
      _
    $region25: #{resnet50fc_forward.1} parent=1 // pred_fallthru
      _
    // Predicated region
    $region26: #{resnet50fc_forward.1} parent=1 // pred_check
      _
    $region27: #{resnet50fc_forward.1} parent=1 // pred_check_branch
      %26 = sbr.rel (0) target = $region29
    $region28: #{resnet50fc_forward.1} parent=1 // pred_region
      _
    $region29: #{resnet50fc_forward.1} parent=1 // pred_fallthru
      _
    %v28 = vld [vmem:[%s0] sm:$0xf]
    %v29 = vld [vmem:[%s1] sm:$0xff]
    %v30 = vld [vmem:[%s1 + $0x8] sm:$0xff]
    %v31 = vld [vmem:[%s1 + $0x10] sm:$0xff]
    %v32 = vld [vmem:[%s1 + $0x18] sm:$0xff]
    %v33 = vld [vmem:[%s1 + $0x20] sm:$0xff]
    %v34 = vld [vmem:[%s1 + $0x28] sm:$0xff]
    %v35 = vld [vmem:[%s1 + $0x30] sm:$0xff]
    %v36 = vld [vmem:[%s1 + $0x38] sm:$0xff]
    %v37 = vld [vmem:[%s2] sm:$0xf]
    %v39 = vperm.slane %v37, 0
    %v40 = vperm.slane %v37, 1
    %v41 = vperm.slane %v37, 2
    %v42 = vperm.slane %v37, 3
    %v55 = vunpack.c.l.b16 %v29
    %v56 = vunpack.c.h.b16 %v29
    %v57 = vunpack.c.l.b16 %v30
    %v58 = vunpack.c.h.b16 %v30
    %v59 = vunpack.c.l.b16 %v31
    %v60 = vunpack.c.h.b16 %v31
    %v61 = vunpack.c.l.b16 %v32
    %v62 = vunpack.c.h.b16 %v32
    %v63 = vunpack.c.l.b16 %v33
    %v64 = vunpack.c.h.b16 %v33
    %v65 = vunpack.c.l.b16 %v34
    %v66 = vunpack.c.h.b16 %v34
    %v67 = vunpack.c.l.b16 %v35
    %v68 = vunpack.c.h.b16 %v35
    %v69 = vunpack.c.l.b16 %v36
    %v70 = vunpack.c.h.b16 %v36
    %v71 = vpack.c.b16 %v59, %v55
    %v72 = vpack.c.b16 %v60, %v56
    %v73 = vpack.c.b16 %v61, %v57
    %v74 = vpack.c.b16 %v62, %v58
    %v75 = vpack.c.b16 %v67, %v63
    %v76 = vpack.c.b16 %v68, %v64
    %v77 = vpack.c.b16 %v69, %v65
    %v78 = vpack.c.b16 %v70, %v66
    %vm87 = vcmask 261120
    %v89 = vsel %vm87, %v28, 0
    %91 = vmatpush.bf16.msra.mxu0 0
    %92 = vmatpush.bf16.msra.mxu0 0
    %93 = vmatpush.bf16.msra.mxu0 0
    %94 = vmatpush.bf16.msra.mxu0 0
    %95 = vmatpush.bf16.msra.mxu0 0
    %96 = vmatpush.bf16.msra.mxu0 0
    %97 = vmatpush.bf16.msra.mxu0 %v75
    %98 = vmatpush.bf16.msra.mxu0 %v71
    %99 = vmatmul.bf16.gmra.mxu0 %v89
    %v100 = vpop.f32.mrf.mxu0
    %v101 = vadd.f32 %v39, %v100
    %v102 = vpop.f32.mrf.mxu0
    %103 = vdwg.mxu0
    %104 = vmatpush.bf16.msra.mxu0 0
    %105 = vmatpush.bf16.msra.mxu0 0
    %106 = vmatpush.bf16.msra.mxu0 0
    %107 = vmatpush.bf16.msra.mxu0 0
    %108 = vmatpush.bf16.msra.mxu0 0
    %109 = vmatpush.bf16.msra.mxu0 0
    %110 = vmatpush.bf16.msra.mxu0 %v76
    %111 = vmatpush.bf16.msra.mxu0 %v72
    %112 = vmatmul.bf16.gmra.mxu0 %v89
    %v113 = vpop.f32.mrf.mxu0
    %v114 = vadd.f32 %v40, %v113
    %v115 = vpop.f32.mrf.mxu0
    %116 = vdwg.mxu0
    %117 = vmatpush.bf16.msra.mxu0 0
    %118 = vmatpush.bf16.msra.mxu0 0
    %119 = vmatpush.bf16.msra.mxu0 0
    %120 = vmatpush.bf16.msra.mxu0 0
    %121 = vmatpush.bf16.msra.mxu0 0
    %122 = vmatpush.bf16.msra.mxu0 0
    %123 = vmatpush.bf16.msra.mxu0 %v77
    %124 = vmatpush.bf16.msra.mxu0 %v73
    %125 = vmatmul.bf16.gmra.mxu0 %v89
    %v126 = vpop.f32.mrf.mxu0
    %v127 = vadd.f32 %v41, %v126
    %v128 = vpop.f32.mrf.mxu0
    %129 = vdwg.mxu0
    %130 = vmatpush.bf16.msra.mxu0 0
    %131 = vmatpush.bf16.msra.mxu0 0
    %132 = vmatpush.bf16.msra.mxu0 0
    %133 = vmatpush.bf16.msra.mxu0 0
    %134 = vmatpush.bf16.msra.mxu0 0
    %135 = vmatpush.bf16.msra.mxu0 0
    %136 = vmatpush.bf16.msra.mxu0 %v78
    %137 = vmatpush.bf16.msra.mxu0 %v74
    %138 = vmatmul.bf16.gmra.mxu0 %v89
    %v139 = vpop.f32.mrf.mxu0
    %v140 = vadd.f32 %v42, %v139
    %v141 = vpop.f32.mrf.mxu0
    %142 = vdwg.mxu0
    %v143 = vmax.f32 %v101, 0.0
    %v144 = vmax.f32 %v114, 0.0
    %v145 = vmax.f32 %v127, 0.0
    %v146 = vmax.f32 %v140, 0.0
    %v147 = vpack.c.bf16 %v143, %v143
    %v148 = vpack.c.bf16 %v144, %v144
    %v149 = vpack.c.bf16 %v145, %v145
    %v150 = vpack.c.bf16 %v146, %v146
    %v151 = vld [vmem:[%s3] sm:$0xff]
    %v152 = vld [vmem:[%s3 + $0x8] sm:$0xff]
    %v153 = vld [vmem:[%s3 + $0x10] sm:$0xff]
    %v154 = vld [vmem:[%s3 + $0x18] sm:$0xff]
    %v155 = vld [vmem:[%s3 + $0x20] sm:$0xff]
    %v156 = vld [vmem:[%s3 + $0x28] sm:$0xff]
    %v157 = vld [vmem:[%s3 + $0x30] sm:$0xff]
    %v158 = vld [vmem:[%s3 + $0x38] sm:$0xff]
    %v159 = vld [vmem:[%s3 + $0x40] sm:$0xff]
    %v160 = vld [vmem:[%s3 + $0x48] sm:$0xff]
    %v161 = vld [vmem:[%s3 + $0x50] sm:$0xff]
    %v162 = vld [vmem:[%s3 + $0x58] sm:$0xff]
    %v163 = vld [vmem:[%s3 + $0x60] sm:$0xff]
    %v164 = vld [vmem:[%s3 + $0x68] sm:$0xff]
    %v165 = vld [vmem:[%s3 + $0x70] sm:$0xff]
    %v166 = vld [vmem:[%s3 + $0x78] sm:$0xff]
    %v167 = vld [vmem:[%s3 + $0x80] sm:$0xff]
    %v168 = vld [vmem:[%s3 + $0x88] sm:$0xff]
    %v169 = vld [vmem:[%s3 + $0x90] sm:$0xff]
    %v170 = vld [vmem:[%s3 + $0x98] sm:$0xff]
    %v171 = vld [vmem:[%s3 + $0xa0] sm:$0xff]
    %v172 = vld [vmem:[%s3 + $0xa8] sm:$0xff]
    %v173 = vld [vmem:[%s3 + $0xb0] sm:$0xff]
    %v174 = vld [vmem:[%s3 + $0xb8] sm:$0xff]
    %v175 = vld [vmem:[%s3 + $0xc0] sm:$0xff]
    %v176 = vld [vmem:[%s3 + $0xc8] sm:$0xff]
    %v177 = vld [vmem:[%s3 + $0xd0] sm:$0xff]
    %v178 = vld [vmem:[%s3 + $0xd8] sm:$0xff]
    %v179 = vld [vmem:[%s3 + $0xe0] sm:$0xff]
    %v180 = vld [vmem:[%s3 + $0xe8] sm:$0xff]
    %v181 = vld [vmem:[%s3 + $0xf0] sm:$0xff]
    %v182 = vld [vmem:[%s3 + $0xf8] sm:$0xff]
    %v183 = vld [vmem:[%s3 + $0x100] sm:$0xff]
    %v184 = vld [vmem:[%s3 + $0x108] sm:$0xff]
    %v185 = vld [vmem:[%s3 + $0x110] sm:$0xff]
    %v186 = vld [vmem:[%s3 + $0x118] sm:$0xff]
    %v187 = vld [vmem:[%s3 + $0x120] sm:$0xff]
    %v188 = vld [vmem:[%s3 + $0x128] sm:$0xff]
    %v189 = vld [vmem:[%s3 + $0x130] sm:$0xff]
    %v190 = vld [vmem:[%s3 + $0x138] sm:$0xff]
    %v191 = vld [vmem:[%s3 + $0x140] sm:$0xff]
    %v192 = vld [vmem:[%s3 + $0x148] sm:$0xff]
    %v193 = vld [vmem:[%s3 + $0x150] sm:$0xff]
    %v194 = vld [vmem:[%s3 + $0x158] sm:$0xff]
    %v195 = vld [vmem:[%s3 + $0x160] sm:$0xff]
    %v196 = vld [vmem:[%s3 + $0x168] sm:$0xff]
    %v197 = vld [vmem:[%s3 + $0x170] sm:$0xff]
    %v198 = vld [vmem:[%s3 + $0x178] sm:$0xff]
    %v199 = vld [vmem:[%s3 + $0x180] sm:$0xff]
    %v200 = vld [vmem:[%s3 + $0x188] sm:$0xff]
    %v201 = vld [vmem:[%s3 + $0x190] sm:$0xff]
    %v202 = vld [vmem:[%s3 + $0x198] sm:$0xff]
    %v203 = vld [vmem:[%s3 + $0x1a0] sm:$0xff]
    %v204 = vld [vmem:[%s3 + $0x1a8] sm:$0xff]
    %v205 = vld [vmem:[%s3 + $0x1b0] sm:$0xff]
    %v206 = vld [vmem:[%s3 + $0x1b8] sm:$0xff]
    %v207 = vld [vmem:[%s3 + $0x1c0] sm:$0xff]
    %v208 = vld [vmem:[%s3 + $0x1c8] sm:$0xff]
    %v209 = vld [vmem:[%s3 + $0x1d0] sm:$0xff]
    %v210 = vld [vmem:[%s3 + $0x1d8] sm:$0xff]
    %v211 = vld [vmem:[%s3 + $0x1e0] sm:$0xff]
    %v212 = vld [vmem:[%s3 + $0x1e8] sm:$0xff]
    %v213 = vld [vmem:[%s3 + $0x1f0] sm:$0xff]
    %v214 = vld [vmem:[%s3 + $0x1f8] sm:$0xff]
    %v215 = vld [vmem:[%s4] sm:$0x3]
    %v217 = vperm.slane %v215, 0
    %v218 = vperm.slane %v215, 1
    %v285 = vunpack.c.l.b16 %v151
    %v286 = vunpack.c.h.b16 %v151
    %v287 = vunpack.c.l.b16 %v152
    %v288 = vunpack.c.h.b16 %v152
    %v289 = vunpack.c.l.b16 %v153
    %v290 = vunpack.c.h.b16 %v153
    %v291 = vunpack.c.l.b16 %v154
    %v292 = vunpack.c.h.b16 %v154
    %v293 = vunpack.c.l.b16 %v155
    %v294 = vunpack.c.h.b16 %v155
    %v295 = vunpack.c.l.b16 %v156
    %v296 = vunpack.c.h.b16 %v156
    %v297 = vunpack.c.l.b16 %v157
    %v298 = vunpack.c.h.b16 %v157
    %v299 = vunpack.c.l.b16 %v158
    %v300 = vunpack.c.h.b16 %v158
    %v301 = vunpack.c.l.b16 %v159
    %v302 = vunpack.c.h.b16 %v159
    %v303 = vunpack.c.l.b16 %v160
    %v304 = vunpack.c.h.b16 %v160
    %v305 = vunpack.c.l.b16 %v161
    %v306 = vunpack.c.h.b16 %v161
    %v307 = vunpack.c.l.b16 %v162
    %v308 = vunpack.c.h.b16 %v162
    %v309 = vunpack.c.l.b16 %v163
    %v310 = vunpack.c.h.b16 %v163
    %v311 = vunpack.c.l.b16 %v164
    %v312 = vunpack.c.h.b16 %v164
    %v313 = vunpack.c.l.b16 %v165
    %v314 = vunpack.c.h.b16 %v165
    %v315 = vunpack.c.l.b16 %v166
    %v316 = vunpack.c.h.b16 %v166
    %v317 = vunpack.c.l.b16 %v167
    %v318 = vunpack.c.h.b16 %v167
    %v319 = vunpack.c.l.b16 %v168
    %v320 = vunpack.c.h.b16 %v168
    %v321 = vunpack.c.l.b16 %v169
    %v322 = vunpack.c.h.b16 %v169
    %v323 = vunpack.c.l.b16 %v170
    %v324 = vunpack.c.h.b16 %v170
    %v325 = vunpack.c.l.b16 %v171
    %v326 = vunpack.c.h.b16 %v171
    %v327 = vunpack.c.l.b16 %v172
    %v328 = vunpack.c.h.b16 %v172
    %v329 = vunpack.c.l.b16 %v173
    %v330 = vunpack.c.h.b16 %v173
    %v331 = vunpack.c.l.b16 %v174
    %v332 = vunpack.c.h.b16 %v174
    %v333 = vunpack.c.l.b16 %v175
    %v334 = vunpack.c.h.b16 %v175
    %v335 = vunpack.c.l.b16 %v176
    %v336 = vunpack.c.h.b16 %v176
    %v337 = vunpack.c.l.b16 %v177
    %v338 = vunpack.c.h.b16 %v177
    %v339 = vunpack.c.l.b16 %v178
    %v340 = vunpack.c.h.b16 %v178
    %v341 = vunpack.c.l.b16 %v179
    %v342 = vunpack.c.h.b16 %v179
    %v343 = vunpack.c.l.b16 %v180
    %v344 = vunpack.c.h.b16 %v180
    %v345 = vunpack.c.l.b16 %v181
    %v346 = vunpack.c.h.b16 %v181
    %v347 = vunpack.c.l.b16 %v182
    %v348 = vunpack.c.h.b16 %v182
    %v349 = vunpack.c.l.b16 %v183
    %v350 = vunpack.c.h.b16 %v183
    %v351 = vunpack.c.l.b16 %v184
    %v352 = vunpack.c.h.b16 %v184
    %v353 = vunpack.c.l.b16 %v185
    %v354 = vunpack.c.h.b16 %v185
    %v355 = vunpack.c.l.b16 %v186
    %v356 = vunpack.c.h.b16 %v186
    %v357 = vunpack.c.l.b16 %v187
    %v358 = vunpack.c.h.b16 %v187
    %v359 = vunpack.c.l.b16 %v188
    %v360 = vunpack.c.h.b16 %v188
    %v361 = vunpack.c.l.b16 %v189
    %v362 = vunpack.c.h.b16 %v189
    %v363 = vunpack.c.l.b16 %v190
    %v364 = vunpack.c.h.b16 %v190
    %v365 = vunpack.c.l.b16 %v191
    %v366 = vunpack.c.h.b16 %v191
    %v367 = vunpack.c.l.b16 %v192
    %v368 = vunpack.c.h.b16 %v192
    %v369 = vunpack.c.l.b16 %v193
    %v370 = vunpack.c.h.b16 %v193
    %v371 = vunpack.c.l.b16 %v194
    %v372 = vunpack.c.h.b16 %v194
    %v373 = vunpack.c.l.b16 %v195
    %v374 = vunpack.c.h.b16 %v195
    %v375 = vunpack.c.l.b16 %v196
    %v376 = vunpack.c.h.b16 %v196
    %v377 = vunpack.c.l.b16 %v197
    %v378 = vunpack.c.h.b16 %v197
    %v379 = vunpack.c.l.b16 %v198
    %v380 = vunpack.c.h.b16 %v198
    %v381 = vunpack.c.l.b16 %v199
    %v382 = vunpack.c.h.b16 %v199
    %v383 = vunpack.c.l.b16 %v200
    %v384 = vunpack.c.h.b16 %v200
    %v385 = vunpack.c.l.b16 %v201
    %v386 = vunpack.c.h.b16 %v201
    %v387 = vunpack.c.l.b16 %v202
    %v388 = vunpack.c.h.b16 %v202
    %v389 = vunpack.c.l.b16 %v203
    %v390 = vunpack.c.h.b16 %v203
    %v391 = vunpack.c.l.b16 %v204
    %v392 = vunpack.c.h.b16 %v204
    %v393 = vunpack.c.l.b16 %v205
    %v394 = vunpack.c.h.b16 %v205
    %v395 = vunpack.c.l.b16 %v206
    %v396 = vunpack.c.h.b16 %v206
    %v397 = vunpack.c.l.b16 %v207
    %v398 = vunpack.c.h.b16 %v207
    %v399 = vunpack.c.l.b16 %v208
    %v400 = vunpack.c.h.b16 %v208
    %v401 = vunpack.c.l.b16 %v209
    %v402 = vunpack.c.h.b16 %v209
    %v403 = vunpack.c.l.b16 %v210
    %v404 = vunpack.c.h.b16 %v210
    %v405 = vunpack.c.l.b16 %v211
    %v406 = vunpack.c.h.b16 %v211
    %v407 = vunpack.c.l.b16 %v212
    %v408 = vunpack.c.h.b16 %v212
    %v409 = vunpack.c.l.b16 %v213
    %v410 = vunpack.c.h.b16 %v213
    %v411 = vunpack.c.l.b16 %v214
    %v412 = vunpack.c.h.b16 %v214
    %v413 = vpack.c.b16 %v287, %v285
    %v414 = vpack.c.b16 %v288, %v286
    %v415 = vpack.c.b16 %v291, %v289
    %v416 = vpack.c.b16 %v292, %v290
    %v417 = vpack.c.b16 %v295, %v293
    %v418 = vpack.c.b16 %v296, %v294
    %v419 = vpack.c.b16 %v299, %v297
    %v420 = vpack.c.b16 %v300, %v298
    %v421 = vpack.c.b16 %v303, %v301
    %v422 = vpack.c.b16 %v304, %v302
    %v423 = vpack.c.b16 %v307, %v305
    %v424 = vpack.c.b16 %v308, %v306
    %v425 = vpack.c.b16 %v311, %v309
    %v426 = vpack.c.b16 %v312, %v310
    %v427 = vpack.c.b16 %v315, %v313
    %v428 = vpack.c.b16 %v316, %v314
    %v429 = vpack.c.b16 %v319, %v317
    %v430 = vpack.c.b16 %v320, %v318
    %v431 = vpack.c.b16 %v323, %v321
    %v432 = vpack.c.b16 %v324, %v322
    %v433 = vpack.c.b16 %v327, %v325
    %v434 = vpack.c.b16 %v328, %v326
    %v435 = vpack.c.b16 %v331, %v329
    %v436 = vpack.c.b16 %v332, %v330
    %v437 = vpack.c.b16 %v335, %v333
    %v438 = vpack.c.b16 %v336, %v334
    %v439 = vpack.c.b16 %v339, %v337
    %v440 = vpack.c.b16 %v340, %v338
    %v441 = vpack.c.b16 %v343, %v341
    %v442 = vpack.c.b16 %v344, %v342
    %v443 = vpack.c.b16 %v347, %v345
    %v444 = vpack.c.b16 %v348, %v346
    %v445 = vpack.c.b16 %v351, %v349
    %v446 = vpack.c.b16 %v352, %v350
    %v447 = vpack.c.b16 %v355, %v353
    %v448 = vpack.c.b16 %v356, %v354
    %v449 = vpack.c.b16 %v359, %v357
    %v450 = vpack.c.b16 %v360, %v358
    %v451 = vpack.c.b16 %v363, %v361
    %v452 = vpack.c.b16 %v364, %v362
    %v453 = vpack.c.b16 %v367, %v365
    %v454 = vpack.c.b16 %v368, %v366
    %v455 = vpack.c.b16 %v371, %v369
    %v456 = vpack.c.b16 %v372, %v370
    %v457 = vpack.c.b16 %v375, %v373
    %v458 = vpack.c.b16 %v376, %v374
    %v459 = vpack.c.b16 %v379, %v377
    %v460 = vpack.c.b16 %v380, %v378
    %v461 = vpack.c.b16 %v383, %v381
    %v462 = vpack.c.b16 %v384, %v382
    %v463 = vpack.c.b16 %v387, %v385
    %v464 = vpack.c.b16 %v388, %v386
    %v465 = vpack.c.b16 %v391, %v389
    %v466 = vpack.c.b16 %v392, %v390
    %v467 = vpack.c.b16 %v395, %v393
    %v468 = vpack.c.b16 %v396, %v394
    %v469 = vpack.c.b16 %v399, %v397
    %v470 = vpack.c.b16 %v400, %v398
    %v471 = vpack.c.b16 %v403, %v401
    %v472 = vpack.c.b16 %v404, %v402
    %v473 = vpack.c.b16 %v407, %v405
    %v474 = vpack.c.b16 %v408, %v406
    %v475 = vpack.c.b16 %v411, %v409
    %v476 = vpack.c.b16 %v412, %v410
    %541 = vmatpush.bf16.msra.mxu0 %v427
    %542 = vmatpush.bf16.msra.mxu0 %v425
    %543 = vmatpush.bf16.msra.mxu0 %v423
    %544 = vmatpush.bf16.msra.mxu0 %v421
    %545 = vmatpush.bf16.msra.mxu0 %v419
    %546 = vmatpush.bf16.msra.mxu0 %v417
    %547 = vmatpush.bf16.msra.mxu0 %v415
    %548 = vmatpush.bf16.msra.mxu0 %v413
    %549 = vmatmul.bf16.gmra.mxu0 %v147
    %v550 = vpop.f32.mrf.mxu0
    %v551 = vadd.f32 %v217, %v550
    %v552 = vpop.f32.mrf.mxu0
    %553 = vdwg.mxu0
    %554 = vmatpush.bf16.msra.mxu0 %v443
    %555 = vmatpush.bf16.msra.mxu0 %v441
    %556 = vmatpush.bf16.msra.mxu0 %v439
    %557 = vmatpush.bf16.msra.mxu0 %v437
    %558 = vmatpush.bf16.msra.mxu0 %v435
    %559 = vmatpush.bf16.msra.mxu0 %v433
    %560 = vmatpush.bf16.msra.mxu0 %v431
    %561 = vmatpush.bf16.msra.mxu0 %v429
    %562 = vmatmul.bf16.gmra.mxu0 %v148
    %v563 = vpop.f32.mrf.mxu0
    %v564 = vadd.f32 %v551, %v563
    %v565 = vpop.f32.mrf.mxu0
    %566 = vdwg.mxu0
    %567 = vmatpush.bf16.msra.mxu0 %v459
    %568 = vmatpush.bf16.msra.mxu0 %v457
    %569 = vmatpush.bf16.msra.mxu0 %v455
    %570 = vmatpush.bf16.msra.mxu0 %v453
    %571 = vmatpush.bf16.msra.mxu0 %v451
    %572 = vmatpush.bf16.msra.mxu0 %v449
    %573 = vmatpush.bf16.msra.mxu0 %v447
    %574 = vmatpush.bf16.msra.mxu0 %v445
    %575 = vmatmul.bf16.gmra.mxu0 %v149
    %v576 = vpop.f32.mrf.mxu0
    %v577 = vadd.f32 %v564, %v576
    %v578 = vpop.f32.mrf.mxu0
    %579 = vdwg.mxu0
    %580 = vmatpush.bf16.msra.mxu0 %v475
    %581 = vmatpush.bf16.msra.mxu0 %v473
    %582 = vmatpush.bf16.msra.mxu0 %v471
    %583 = vmatpush.bf16.msra.mxu0 %v469
    %584 = vmatpush.bf16.msra.mxu0 %v467
    %585 = vmatpush.bf16.msra.mxu0 %v465
    %586 = vmatpush.bf16.msra.mxu0 %v463
    %587 = vmatpush.bf16.msra.mxu0 %v461
    %588 = vmatmul.bf16.gmra.mxu0 %v150
    %v589 = vpop.f32.mrf.mxu0
    %v590 = vadd.f32 %v577, %v589
    %v591 = vpop.f32.mrf.mxu0
    %592 = vdwg.mxu0
    %593 = vmatpush.bf16.msra.mxu0 %v428
    %594 = vmatpush.bf16.msra.mxu0 %v426
    %595 = vmatpush.bf16.msra.mxu0 %v424
    %596 = vmatpush.bf16.msra.mxu0 %v422
    %597 = vmatpush.bf16.msra.mxu0 %v420
    %598 = vmatpush.bf16.msra.mxu0 %v418
    %599 = vmatpush.bf16.msra.mxu0 %v416
    %600 = vmatpush.bf16.msra.mxu0 %v414
    %601 = vmatmul.bf16.gmra.mxu0 %v147
    %v602 = vpop.f32.mrf.mxu0
    %v603 = vadd.f32 %v218, %v602
    %v604 = vpop.f32.mrf.mxu0
    %605 = vdwg.mxu0
    %606 = vmatpush.bf16.msra.mxu0 %v444
    %607 = vmatpush.bf16.msra.mxu0 %v442
    %608 = vmatpush.bf16.msra.mxu0 %v440
    %609 = vmatpush.bf16.msra.mxu0 %v438
    %610 = vmatpush.bf16.msra.mxu0 %v436
    %611 = vmatpush.bf16.msra.mxu0 %v434
    %612 = vmatpush.bf16.msra.mxu0 %v432
    %613 = vmatpush.bf16.msra.mxu0 %v430
    %614 = vmatmul.bf16.gmra.mxu0 %v148
    %v615 = vpop.f32.mrf.mxu0
    %v616 = vadd.f32 %v603, %v615
    %v617 = vpop.f32.mrf.mxu0
    %618 = vdwg.mxu0
    %619 = vmatpush.bf16.msra.mxu0 %v460
    %620 = vmatpush.bf16.msra.mxu0 %v458
    %621 = vmatpush.bf16.msra.mxu0 %v456
    %622 = vmatpush.bf16.msra.mxu0 %v454
    %623 = vmatpush.bf16.msra.mxu0 %v452
    %624 = vmatpush.bf16.msra.mxu0 %v450
    %625 = vmatpush.bf16.msra.mxu0 %v448
    %626 = vmatpush.bf16.msra.mxu0 %v446
    %627 = vmatmul.bf16.gmra.mxu0 %v149
    %v628 = vpop.f32.mrf.mxu0
    %v629 = vadd.f32 %v616, %v628
    %v630 = vpop.f32.mrf.mxu0
    %631 = vdwg.mxu0
    %632 = vmatpush.bf16.msra.mxu0 %v476
    %633 = vmatpush.bf16.msra.mxu0 %v474
    %634 = vmatpush.bf16.msra.mxu0 %v472
    %635 = vmatpush.bf16.msra.mxu0 %v470
    %636 = vmatpush.bf16.msra.mxu0 %v468
    %637 = vmatpush.bf16.msra.mxu0 %v466
    %638 = vmatpush.bf16.msra.mxu0 %v464
    %639 = vmatpush.bf16.msra.mxu0 %v462
    %640 = vmatmul.bf16.gmra.mxu0 %v150
    %v641 = vpop.f32.mrf.mxu0
    %v642 = vadd.f32 %v629, %v641
    %v643 = vpop.f32.mrf.mxu0
    %644 = vdwg.mxu0
    %v645 = vmax.f32 %v590, 0.0
    %v646 = vmax.f32 %v642, 0.0
    %v647 = vpack.c.bf16 %v645, %v645
    %v648 = vpack.c.bf16 %v646, %v646
    %v649 = vld [vmem:[%s5] sm:$0xff]
    %v650 = vld [vmem:[%s5 + $0x8] sm:$0xff]
    %v651 = vld [vmem:[%s5 + $0x10] sm:$0xff]
    %v652 = vld [vmem:[%s5 + $0x18] sm:$0xff]
    %v653 = vld [vmem:[%s5 + $0x20] sm:$0xff]
    %v654 = vld [vmem:[%s5 + $0x28] sm:$0xff]
    %v655 = vld [vmem:[%s5 + $0x30] sm:$0xff]
    %v656 = vld [vmem:[%s5 + $0x38] sm:$0xff]
    %v657 = vld [vmem:[%s5 + $0x40] sm:$0xff]
    %v658 = vld [vmem:[%s5 + $0x48] sm:$0xff]
    %v659 = vld [vmem:[%s5 + $0x50] sm:$0xff]
    %v660 = vld [vmem:[%s5 + $0x58] sm:$0xff]
    %v661 = vld [vmem:[%s5 + $0x60] sm:$0xff]
    %v662 = vld [vmem:[%s5 + $0x68] sm:$0xff]
    %v663 = vld [vmem:[%s5 + $0x70] sm:$0xff]
    %v664 = vld [vmem:[%s5 + $0x78] sm:$0xff]
    %v665 = vld [vmem:[%s5 + $0x80] sm:$0xff]
    %v666 = vld [vmem:[%s5 + $0x88] sm:$0xff]
    %v667 = vld [vmem:[%s5 + $0x90] sm:$0xff]
    %v668 = vld [vmem:[%s5 + $0x98] sm:$0xff]
    %v669 = vld [vmem:[%s5 + $0xa0] sm:$0xff]
    %v670 = vld [vmem:[%s5 + $0xa8] sm:$0xff]
    %v671 = vld [vmem:[%s5 + $0xb0] sm:$0xff]
    %v672 = vld [vmem:[%s5 + $0xb8] sm:$0xff]
    %v673 = vld [vmem:[%s5 + $0xc0] sm:$0xff]
    %v674 = vld [vmem:[%s5 + $0xc8] sm:$0xff]
    %v675 = vld [vmem:[%s5 + $0xd0] sm:$0xff]
    %v676 = vld [vmem:[%s5 + $0xd8] sm:$0xff]
    %v677 = vld [vmem:[%s5 + $0xe0] sm:$0xff]
    %v678 = vld [vmem:[%s5 + $0xe8] sm:$0xff]
    %v679 = vld [vmem:[%s5 + $0xf0] sm:$0xff]
    %v680 = vld [vmem:[%s5 + $0xf8] sm:$0xff]
    %v681 = vld [vmem:[%s6] sm:$0x3]
    %v683 = vperm.slane %v681, 0
    %v684 = vperm.slane %v681, 1
    %v719 = vunpack.c.l.b16 %v649
    %v720 = vunpack.c.h.b16 %v649
    %v721 = vunpack.c.l.b16 %v650
    %v722 = vunpack.c.h.b16 %v650
    %v723 = vunpack.c.l.b16 %v651
    %v724 = vunpack.c.h.b16 %v651
    %v725 = vunpack.c.l.b16 %v652
    %v726 = vunpack.c.h.b16 %v652
    %v727 = vunpack.c.l.b16 %v653
    %v728 = vunpack.c.h.b16 %v653
    %v729 = vunpack.c.l.b16 %v654
    %v730 = vunpack.c.h.b16 %v654
    %v731 = vunpack.c.l.b16 %v655
    %v732 = vunpack.c.h.b16 %v655
    %v733 = vunpack.c.l.b16 %v656
    %v734 = vunpack.c.h.b16 %v656
    %v735 = vunpack.c.l.b16 %v657
    %v736 = vunpack.c.h.b16 %v657
    %v737 = vunpack.c.l.b16 %v658
    %v738 = vunpack.c.h.b16 %v658
    %v739 = vunpack.c.l.b16 %v659
    %v740 = vunpack.c.h.b16 %v659
    %v741 = vunpack.c.l.b16 %v660
    %v742 = vunpack.c.h.b16 %v660
    %v743 = vunpack.c.l.b16 %v661
    %v744 = vunpack.c.h.b16 %v661
    %v745 = vunpack.c.l.b16 %v662
    %v746 = vunpack.c.h.b16 %v662
    %v747 = vunpack.c.l.b16 %v663
    %v748 = vunpack.c.h.b16 %v663
    %v749 = vunpack.c.l.b16 %v664
    %v750 = vunpack.c.h.b16 %v664
    %v751 = vunpack.c.l.b16 %v665
    %v752 = vunpack.c.h.b16 %v665
    %v753 = vunpack.c.l.b16 %v666
    %v754 = vunpack.c.h.b16 %v666
    %v755 = vunpack.c.l.b16 %v667
    %v756 = vunpack.c.h.b16 %v667
    %v757 = vunpack.c.l.b16 %v668
    %v758 = vunpack.c.h.b16 %v668
    %v759 = vunpack.c.l.b16 %v669
    %v760 = vunpack.c.h.b16 %v669
    %v761 = vunpack.c.l.b16 %v670
    %v762 = vunpack.c.h.b16 %v670
    %v763 = vunpack.c.l.b16 %v671
    %v764 = vunpack.c.h.b16 %v671
    %v765 = vunpack.c.l.b16 %v672
    %v766 = vunpack.c.h.b16 %v672
    %v767 = vunpack.c.l.b16 %v673
    %v768 = vunpack.c.h.b16 %v673
    %v769 = vunpack.c.l.b16 %v674
    %v770 = vunpack.c.h.b16 %v674
    %v771 = vunpack.c.l.b16 %v675
    %v772 = vunpack.c.h.b16 %v675
    %v773 = vunpack.c.l.b16 %v676
    %v774 = vunpack.c.h.b16 %v676
    %v775 = vunpack.c.l.b16 %v677
    %v776 = vunpack.c.h.b16 %v677
    %v777 = vunpack.c.l.b16 %v678
    %v778 = vunpack.c.h.b16 %v678
    %v779 = vunpack.c.l.b16 %v679
    %v780 = vunpack.c.h.b16 %v679
    %v781 = vunpack.c.l.b16 %v680
    %v782 = vunpack.c.h.b16 %v680
    %v783 = vpack.c.b16 %v721, %v719
    %v784 = vpack.c.b16 %v722, %v720
    %v785 = vpack.c.b16 %v725, %v723
    %v786 = vpack.c.b16 %v726, %v724
    %v787 = vpack.c.b16 %v729, %v727
    %v788 = vpack.c.b16 %v730, %v728
    %v789 = vpack.c.b16 %v733, %v731
    %v790 = vpack.c.b16 %v734, %v732
    %v791 = vpack.c.b16 %v737, %v735
    %v792 = vpack.c.b16 %v738, %v736
    %v793 = vpack.c.b16 %v741, %v739
    %v794 = vpack.c.b16 %v742, %v740
    %v795 = vpack.c.b16 %v745, %v743
    %v796 = vpack.c.b16 %v746, %v744
    %v797 = vpack.c.b16 %v749, %v747
    %v798 = vpack.c.b16 %v750, %v748
    %v799 = vpack.c.b16 %v753, %v751
    %v800 = vpack.c.b16 %v754, %v752
    %v801 = vpack.c.b16 %v757, %v755
    %v802 = vpack.c.b16 %v758, %v756
    %v803 = vpack.c.b16 %v761, %v759
    %v804 = vpack.c.b16 %v762, %v760
    %v805 = vpack.c.b16 %v765, %v763
    %v806 = vpack.c.b16 %v766, %v764
    %v807 = vpack.c.b16 %v769, %v767
    %v808 = vpack.c.b16 %v770, %v768
    %v809 = vpack.c.b16 %v773, %v771
    %v810 = vpack.c.b16 %v774, %v772
    %v811 = vpack.c.b16 %v777, %v775
    %v812 = vpack.c.b16 %v778, %v776
    %v813 = vpack.c.b16 %v781, %v779
    %v814 = vpack.c.b16 %v782, %v780
    %847 = vmatpush.bf16.msra.mxu0 %v797
    %848 = vmatpush.bf16.msra.mxu0 %v795
    %849 = vmatpush.bf16.msra.mxu0 %v793
    %850 = vmatpush.bf16.msra.mxu0 %v791
    %851 = vmatpush.bf16.msra.mxu0 %v789
    %852 = vmatpush.bf16.msra.mxu0 %v787
    %853 = vmatpush.bf16.msra.mxu0 %v785
    %854 = vmatpush.bf16.msra.mxu0 %v783
    %855 = vmatmul.bf16.gmra.mxu0 %v647
    %v856 = vpop.f32.mrf.mxu0
    %v857 = vadd.f32 %v683, %v856
    %v858 = vpop.f32.mrf.mxu0
    %859 = vdwg.mxu0
    %860 = vmatpush.bf16.msra.mxu0 %v813
    %861 = vmatpush.bf16.msra.mxu0 %v811
    %862 = vmatpush.bf16.msra.mxu0 %v809
    %863 = vmatpush.bf16.msra.mxu0 %v807
    %864 = vmatpush.bf16.msra.mxu0 %v805
    %865 = vmatpush.bf16.msra.mxu0 %v803
    %866 = vmatpush.bf16.msra.mxu0 %v801
    %867 = vmatpush.bf16.msra.mxu0 %v799
    %868 = vmatmul.bf16.gmra.mxu0 %v648
    %v869 = vpop.f32.mrf.mxu0
    %v870 = vadd.f32 %v857, %v869
    %v871 = vpop.f32.mrf.mxu0
    %872 = vdwg.mxu0
    %873 = vmatpush.bf16.msra.mxu0 %v798
    %874 = vmatpush.bf16.msra.mxu0 %v796
    %875 = vmatpush.bf16.msra.mxu0 %v794
    %876 = vmatpush.bf16.msra.mxu0 %v792
    %877 = vmatpush.bf16.msra.mxu0 %v790
    %878 = vmatpush.bf16.msra.mxu0 %v788
    %879 = vmatpush.bf16.msra.mxu0 %v786
    %880 = vmatpush.bf16.msra.mxu0 %v784
    %881 = vmatmul.bf16.gmra.mxu0 %v647
    %v882 = vpop.f32.mrf.mxu0
    %v883 = vadd.f32 %v684, %v882
    %v884 = vpop.f32.mrf.mxu0
    %885 = vdwg.mxu0
    %886 = vmatpush.bf16.msra.mxu0 %v814
    %887 = vmatpush.bf16.msra.mxu0 %v812
    %888 = vmatpush.bf16.msra.mxu0 %v810
    %889 = vmatpush.bf16.msra.mxu0 %v808
    %890 = vmatpush.bf16.msra.mxu0 %v806
    %891 = vmatpush.bf16.msra.mxu0 %v804
    %892 = vmatpush.bf16.msra.mxu0 %v802
    %893 = vmatpush.bf16.msra.mxu0 %v800
    %894 = vmatmul.bf16.gmra.mxu0 %v648
    %v895 = vpop.f32.mrf.mxu0
    %v896 = vadd.f32 %v883, %v895
    %v897 = vpop.f32.mrf.mxu0
    %898 = vdwg.mxu0
    %899 = vst [vmem:[#allocation2] sm:$0xff] %v870
    %900 = vst [vmem:[#allocation2 + $0x8] sm:$0xff] %v896
    // Predicated region
    $region30: #{resnet50fc_forward.1} parent=1 // pred_check
      _
    $region31: #{resnet50fc_forward.1} parent=1 // pred_check_branch
      %902 = sbr.rel (0) target = $region33
    $region32: #{resnet50fc_forward.1} parent=1 // pred_region
      %904 = vsyncadd [#allocation3], 0
      %s906 = sshll.u32 [#allocation2], 4
      %s907 = int_to_ptr.vmem [resolvable:$true] %s906
      %s908 = sshll.u32 %s7, 4
      %s909 = int_to_ptr.hbm [resolvable:$true] %s908
      %911 = dma.vmem_to_hbm [thread:$0]  %s907, 256, %s909, [#allocation3]
    $region33: #{resnet50fc_forward.1} parent=1 // pred_fallthru
      _
    // Predicated region
    $region34: #{resnet50fc_forward.1} parent=1 // pred_check
      _
    $region35: #{resnet50fc_forward.1} parent=1 // pred_check_branch
      %913 = sbr.rel (0) target = $region37
    $region36: #{resnet50fc_forward.1} parent=1 // pred_region
      %915 = dma.done [#allocation3], 256
    $region37: #{resnet50fc_forward.1} parent=1 // pred_fallthru
      _
    %916 = vsyncpa [#allocation3], 1

</llo_original>
